<compile_context>
chip_gen: v7x
topology: tpu7x:2x2x1
jax: 0.10.0
libtpu: 0.0.40
codegen_flags: <defaults>
</compile_context>

<pallas_src>
import jax
import jax.numpy as jnp
from jax.experimental import pallas as pl
from jax.experimental.pallas import tpu as pltpu


def _round_up(x, m):
    return (x + m - 1) // m * m


def _gen_budget():
    """Return (tk_max, vmem_limit_cap) for the local TPU generation."""
    try:
        cap = pltpu.get_tpu_info().vmem_capacity_bytes
    except Exception:
        cap = 128 << 20
    if cap <= (64 << 20):            # v7x-class part: 64 MiB physical VMEM
        return 2048, 48 << 20
    return 4096, 96 << 20            # v5e / v6e: 128 MiB physical VMEM


def _plan_k(D):
    """Pick the layer-1 contraction tile TK first, then Dp = round_up(D, TK)."""
    tk_max, _ = _gen_budget()
    Dp128 = _round_up(D, 128)
    if Dp128 <= tk_max:
        # Single K step: no per-step overhead to amortize, minimal padding.
        return Dp128, Dp128
    # Large D: choose the largest TK (>= 512) that minimizes padded columns.
    cands = [c for c in (4096, 3072, 2048, 1536, 1024, 768, 512) if c <= tk_max]
    TK = min(cands, key=lambda c: (_round_up(D, c), -c))
    return TK, _round_up(D, TK)


def _plan_b(B):
    """Batch tile TB and padded batch Bp (padding-aware for B > 256)."""
    Bp8 = _round_up(B, 8)
    if Bp8 <= 256:
        return Bp8, Bp8
    TB = min((256, 128, 64), key=lambda t: (_round_up(B, t), -t))
    return TB, _round_up(B, TB)


def _disc_kernel(x_ref, w1_ref, b1_ref, w2_ref, b2_ref, w3_ref, b3_ref,
                 o_ref, acc_ref):
    k = pl.program_id(1)

    @pl.when(k == 0)
    def _():
        acc_ref[...] = jnp.zeros_like(acc_ref)

    # Layer-1 partial contraction on the MXU (bf16 operands, f32 accumulate).
    # astype is a no-op when the wrapper already emitted x in bf16.
    acc_ref[...] += jnp.dot(
        x_ref[...].astype(jnp.bfloat16), w1_ref[...],
        preferred_element_type=jnp.float32)

    @pl.when(k == pl.num_programs(1) - 1)
    def _():
        h1 = acc_ref[...] + b1_ref[...]
        h1 = jnp.maximum(h1, 0.1 * h1)                        # LeakyReLU(0.1)
        h2 = jnp.dot(h1.astype(jnp.bfloat16), w2_ref[...],
                     preferred_element_type=jnp.float32) + b2_ref[...]
        h2 = jnp.maximum(h2, 0.2 * h2)                        # LeakyReLU(0.2)
        # 250 -> 1 head: VPU multiply + lane reduction (w3 padded to 128 lanes)
        # instead of a mostly-empty MXU matmul.
        h3 = jnp.sum(h2 * w3_ref[...], axis=-1, keepdims=True) + b3_ref[...]
        # Lane-dense store: broadcast the scalar-per-row result across all 128
        # lanes so the writeback is an unmasked full-lane vst.
        o_ref[...] = jnp.broadcast_to(jax.nn.sigmoid(h3), o_ref.shape)


def prepare_params(w1, b1, w2, b2, w3, b3):
    """One-time padding + bf16 cast of weights (hoisted out of the forward)."""
    D, H1 = w1.shape
    H2 = w2.shape[1]
    _, Dp = _plan_k(D)              # pad w1 rows up to the planned TK multiple
    H1p = _round_up(H1, 128)
    H2p = _round_up(H2, 128)

    w1p = jnp.zeros((Dp, H1p), jnp.bfloat16).at[:D, :H1].set(
        w1.astype(jnp.bfloat16))
    b1p = jnp.zeros((1, H1p), jnp.float32).at[0, :H1].set(b1)
    w2p = jnp.zeros((H1p, H2p), jnp.bfloat16).at[:H1, :H2].set(
        w2.astype(jnp.bfloat16))
    b2p = jnp.zeros((1, H2p), jnp.float32).at[0, :H2].set(b2)
    # Final layer stored as a (1, H2p) f32 row (used on the VPU, not the MXU).
    w3row = jnp.zeros((1, H2p), jnp.float32).at[0, :H2].set(
        w3.reshape(-1).astype(jnp.float32))
    b3p = jnp.asarray(b3, jnp.float32).reshape(1, 1)
    return (w1p, b1p, w2p, b2p, w3row, b3p)


@jax.jit
def discriminator_forward(data, params):
    """data: (B, C, H, W) float32. params: output of prepare_params.
    Returns (B, 1) float32 in [0, 1]."""
    w1p, b1p, w2p, b2p, w3row, b3p = params
    B = data.shape[0]
    x = data.reshape(B, -1)                                   # torch .view(B,-1)
    D = x.shape[1]
    Dp, H1p = w1p.shape
    H2p = w2p.shape[1]

    # Tile plan (all Python ints at trace time).
    TK, Dp_plan = _plan_k(D)
    assert Dp_plan == Dp, "params were prepared for a different input size"
    TB, Bp = _plan_b(B)
    # TODO(synk): on v7x, when compute/step-overhead bound at B <= 256, a
    # smaller TB (Bp//TB >= 2) would engage both TensorCores; left at one batch
    # tile here because the layer-1 K stream is w1-bandwidth bound.

    pad_b, pad_d = Bp - B, Dp - D
    if pad_b or pad_d:
        # Padding materializes a copy of x anyway -> emit it directly in bf16
        # (fused pad + cast): halves pad write and the kernel's x-tile reads.
        x = jnp.pad(x.astype(jnp.bfloat16), ((0, pad_b), (0, pad_d)))
    else:
        x = x.astype(jnp.float32)   # kernel casts tiles to bf16 on the fly

    grid = (Bp // TB, Dp // TK)

    # VMEM budget: double-buffered streamed tiles + resident operands +
    # lane-dense output tile + f32 accumulator scratch.
    x_bytes = 2 if x.dtype == jnp.bfloat16 else 4
    vmem_est = (
        2 * TB * TK * x_bytes                                   # x tile
        + 2 * TK * H1p * 2                                      # w1 tile (bf16)
        + 2 * (H1p * H2p * 2 + (H1p + 2 * H2p + 1) * 4)         # residents
        + 2 * TB * 128 * 4                                      # out tile
        + TB * H1p * 4                                          # accumulator
    )
    _, vmem_cap = _gen_budget()
    vmem_limit = int(min(max(2 * vmem_est + (8 << 20), 16 << 20), vmem_cap))

    out = pl.pallas_call(
        _disc_kernel,
        out_shape=jax.ShapeDtypeStruct((Bp, 128), jnp.float32),
        grid_spec=pltpu.PrefetchScalarGridSpec(
            num_scalar_prefetch=0,
            grid=grid,
            in_specs=[
                pl.BlockSpec((TB, TK), lambda i, k: (i, k)),      # x (streamed)
                pl.BlockSpec((TK, H1p), lambda i, k: (k, 0)),     # w1 (streamed)
                pl.BlockSpec((1, H1p), lambda i, k: (0, 0)),      # b1 (resident)
                pl.BlockSpec((H1p, H2p), lambda i, k: (0, 0)),    # w2 (resident)
                pl.BlockSpec((1, H2p), lambda i, k: (0, 0)),      # b2 (resident)
                pl.BlockSpec((1, H2p), lambda i, k: (0, 0)),      # w3 row
                pl.BlockSpec((1, 1), lambda i, k: (0, 0)),        # b3
            ],
            out_specs=pl.BlockSpec((TB, 128), lambda i, k: (i, 0)),
            scratch_shapes=[pltpu.VMEM((TB, H1p), jnp.float32)],
        ),
        compiler_params=pltpu.CompilerParams(
            dimension_semantics=("parallel", "arbitrary"),
            vmem_limit_bytes=vmem_limit,
        ),
    )(x, w1p, b1p, w2p, b2p, w3row, b3p)

    return out[:B, :1]


def init_params(key, d_in):
    """Deterministic PyTorch-style (uniform +/- 1/sqrt(fan_in)) init."""
    dims = [(d_in, 500), (500, 250), (250, 1)]
    params = []
    for (fan_in, fan_out) in dims:
        key, kw, kb = jax.random.split(key, 3)
        bound = 1.0 / jnp.sqrt(float(fan_in))
        w = jax.random.uniform(kw, (fan_in, fan_out), jnp.float32, -bound, bound)
        b = jax.random.uniform(kb, (fan_out,), jnp.float32, -bound, bound)
        params += [w, b]
    return params


def _reference(data, w1, b1, w2, b2, w3, b3):
    x = data.reshape(data.shape[0], -1)
    h = x @ w1 + b1
    h = jnp.where(h > 0, h, 0.1 * h)
    h = h @ w2 + b2
    h = jnp.where(h > 0, h, 0.2 * h)
    h = h @ w3 + b3
    return jax.nn.sigmoid(h)


if __name__ == "__main__":
    key = jax.random.PRNGKey(0)
    B, C, H, W = 2, 4, 16, 16          # d_in_shape = (4, 16, 16) -> D = 1024
    d_in = C * H * W

    key, kdata = jax.random.split(key)
    data = jax.random.normal(kdata, (B, C, H, W), jnp.float32)

    w1, b1, w2, b2, w3, b3 = init_params(key, d_in)

    # One-time weight padding / bf16 cast (outside the per-step forward path).
    packed = prepare_params(w1, b1, w2, b2, w3, b3)
    packed = jax.block_until_ready(packed)

    out = discriminator_forward(data, packed)
    out = jax.block_until_ready(out)

    ref = _reference(data, w1, b1, w2, b2, w3, b3)
    assert out.shape == (B, 1), out.shape
    # bf16 weights / activations => looser tolerance than pure-f32.
    assert jnp.allclose(out, ref, atol=2e-2, rtol=2e-2), (out, ref)

    print("KERNEL_OK")
</pallas_src>

<mosaic_0001>
module attributes {stable_mosaic.version = 11 : i64} {
  func.func @_disc_kernel(%arg0: i32, %arg1: i32, %arg2: memref<8x1024xbf16, #tpu.memory_space<vmem>>, %arg3: memref<1024x512xbf16, #tpu.memory_space<vmem>>, %arg4: memref<1x512xf32, #tpu.memory_space<vmem>>, %arg5: memref<512x256xbf16, #tpu.memory_space<vmem>>, %arg6: memref<1x256xf32, #tpu.memory_space<vmem>>, %arg7: memref<1x256xf32, #tpu.memory_space<vmem>>, %arg8: memref<1x1xf32, #tpu.memory_space<vmem>>, %arg9: memref<8x128xf32, #tpu.memory_space<vmem>>, %arg10: memref<8x512xf32, #tpu.memory_space<vmem>>) attributes {dimension_semantics = [#tpu.dimension_semantics<parallel>, #tpu.dimension_semantics<arbitrary>], iteration_bounds = array<i64: 1, 1>, scalar_prefetch = 0 : i64, scratch_operands = 1 : i64, tpu.core_type = #tpu.core_type<tc>, window_params = [{transform_indices = @transform_0, window_bounds = array<i64: 8, 1024>}, {transform_indices = @transform_1, window_bounds = array<i64: 1024, 512>}, {pipeline_mode = #tpu.pipeline_mode<synchronous>, transform_indices = @transform_2, window_bounds = array<i64: 1, 512>}, {pipeline_mode = #tpu.pipeline_mode<synchronous>, transform_indices = @transform_3, window_bounds = array<i64: 512, 256>}, {pipeline_mode = #tpu.pipeline_mode<synchronous>, transform_indices = @transform_4, window_bounds = array<i64: 1, 256>}, {pipeline_mode = #tpu.pipeline_mode<synchronous>, transform_indices = @transform_5, window_bounds = array<i64: 1, 256>}, {pipeline_mode = #tpu.pipeline_mode<synchronous>, transform_indices = @transform_6, window_bounds = array<i64: 1, 1>}, {transform_indices = @transform_7, window_bounds = array<i64: 8, 128>}]} {
    %c0_i32 = arith.constant 0 : i32
    %0 = arith.cmpi eq, %arg1, %c0_i32 : i32
    %1 = arith.extui %0 : i1 to i32
    %c0_i32_0 = arith.constant 0 : i32
    %2 = arith.cmpi ne, %1, %c0_i32_0 : i32
    scf.if %2 {
      %cst_10 = arith.constant 0.000000e+00 : f32
      %12 = vector.broadcast %cst_10 : f32 to vector<8x512xf32>
      %c0_11 = arith.constant 0 : index
      %c0_12 = arith.constant 0 : index
      %13 = vector.load %arg10[%c0_11, %c0_12] : memref<8x512xf32, #tpu.memory_space<vmem>>, vector<8x512xf32>
      tpu.vector_store %arg10[%c0_11, %c0_12], %12 {strides = array<i32>} : memref<8x512xf32, #tpu.memory_space<vmem>>, vector<8x512xf32>,
    } else {
    }
    %c0 = arith.constant 0 : index
    %c0_1 = arith.constant 0 : index
    %3 = vector.load %arg10[%c0, %c0_1] : memref<8x512xf32, #tpu.memory_space<vmem>>, vector<8x512xf32>
    %c0_2 = arith.constant 0 : index
    %c0_3 = arith.constant 0 : index
    %4 = vector.load %arg2[%c0_2, %c0_3] : memref<8x1024xbf16, #tpu.memory_space<vmem>>, vector<8x1024xbf16>
    %c0_4 = arith.constant 0 : index
    %c0_5 = arith.constant 0 : index
    %5 = vector.load %arg3[%c0_4, %c0_5] : memref<1024x512xbf16, #tpu.memory_space<vmem>>, vector<1024x512xbf16>
    %cst = arith.constant dense<0.000000e+00> : vector<8x512xf32>
    %6 = tpu.matmul %4, %5, %cst {dimension_numbers = #tpu.dot_dimension_numbers<[1], [0], [0], [1], [0, 0, 1, 1], [], []>} : vector<8x1024xbf16>, vector<1024x512xbf16>, vector<8x512xf32> -> vector<8x512xf32>
    %7 = arith.addf %3, %6 : vector<8x512xf32>
    %c0_6 = arith.constant 0 : index
    %c0_7 = arith.constant 0 : index
    %8 = vector.load %arg10[%c0_6, %c0_7] : memref<8x512xf32, #tpu.memory_space<vmem>>, vector<8x512xf32>
    tpu.vector_store %arg10[%c0_6, %c0_7], %7 {strides = array<i32>} : memref<8x512xf32, #tpu.memory_space<vmem>>, vector<8x512xf32>,
    %c0_i32_8 = arith.constant 0 : i32
    %9 = arith.cmpi eq, %arg1, %c0_i32_8 : i32
    %10 = arith.extui %9 : i1 to i32
    %c0_i32_9 = arith.constant 0 : i32
    %11 = arith.cmpi ne, %10, %c0_i32_9 : i32
    scf.if %11 {
      %c0_10 = arith.constant 0 : index
      %c0_11 = arith.constant 0 : index
      %12 = vector.load %arg10[%c0_10, %c0_11] : memref<8x512xf32, #tpu.memory_space<vmem>>, vector<8x512xf32>
      %c0_12 = arith.constant 0 : index
      %c0_13 = arith.constant 0 : index
      %13 = vector.load %arg4[%c0_12, %c0_13] : memref<1x512xf32, #tpu.memory_space<vmem>>, vector<1x512xf32>
      %14 = vector.broadcast %13 : vector<1x512xf32> to vector<8x512xf32>
      %15 = arith.addf %12, %14 : vector<8x512xf32>
      %cst_14 = arith.constant 1.000000e-01 : f32
      %16 = vector.broadcast %cst_14 : f32 to vector<8x512xf32>
      %17 = arith.mulf %16, %15 : vector<8x512xf32>
      %18 = arith.maximumf %15, %17 : vector<8x512xf32>
      %19 = arith.truncf %18 : vector<8x512xf32> to vector<8x512xbf16>
      %c0_15 = arith.constant 0 : index
      %c0_16 = arith.constant 0 : index
      %20 = vector.load %arg5[%c0_15, %c0_16] : memref<512x256xbf16, #tpu.memory_space<vmem>>, vector<512x256xbf16>
      %cst_17 = arith.constant dense<0.000000e+00> : vector<8x256xf32>
      %21 = tpu.matmul %19, %20, %cst_17 {dimension_numbers = #tpu.dot_dimension_numbers<[1], [0], [0], [1], [0, 0, 1, 1], [], []>} : vector<8x512xbf16>, vector<512x256xbf16>, vector<8x256xf32> -> vector<8x256xf32>
      %c0_18 = arith.constant 0 : index
      %c0_19 = arith.constant 0 : index
      %22 = vector.load %arg6[%c0_18, %c0_19] : memref<1x256xf32, #tpu.memory_space<vmem>>, vector<1x256xf32>
      %23 = vector.broadcast %22 : vector<1x256xf32> to vector<8x256xf32>
      %24 = arith.addf %21, %23 : vector<8x256xf32>
      %cst_20 = arith.constant 2.000000e-01 : f32
      %25 = vector.broadcast %cst_20 : f32 to vector<8x256xf32>
      %26 = arith.mulf %25, %24 : vector<8x256xf32>
      %27 = arith.maximumf %24, %26 : vector<8x256xf32>
      %c0_21 = arith.constant 0 : index
      %c0_22 = arith.constant 0 : index
      %28 = vector.load %arg7[%c0_21, %c0_22] : memref<1x256xf32, #tpu.memory_space<vmem>>, vector<1x256xf32>
      %29 = vector.broadcast %28 : vector<1x256xf32> to vector<8x256xf32>
      %30 = arith.mulf %27, %29 : vector<8x256xf32>
      %cst_23 = arith.constant dense<0.000000e+00> : vector<8xf32>
      %31 = vector.multi_reduction <add>, %30, %cst_23 [1] : vector<8x256xf32> to vector<8xf32>
      %32 = vector.shape_cast %31 : vector<8xf32> to vector<8x1xf32>
      %c0_24 = arith.constant 0 : index
      %c0_25 = arith.constant 0 : index
      %33 = vector.load %arg8[%c0_24, %c0_25] : memref<1x1xf32, #tpu.memory_space<vmem>>, vector<1x1xf32>
      %34 = vector.broadcast %33 : vector<1x1xf32> to vector<8x1xf32>
      %35 = arith.addf %32, %34 : vector<8x1xf32>
      %36 = arith.negf %35 : vector<8x1xf32>
      %37 = math.exp %36 : vector<8x1xf32>
      %cst_26 = arith.constant 1.000000e+00 : f32
      %38 = vector.broadcast %cst_26 : f32 to vector<8x1xf32>
      %39 = arith.addf %38, %37 : vector<8x1xf32>
      %40 = arith.divf %38, %39 : vector<8x1xf32>
      %41 = vector.shape_cast %40 : vector<8x1xf32> to vector<8x1xf32>
      %42 = vector.broadcast %41 : vector<8x1xf32> to vector<8x128xf32>
      %c0_27 = arith.constant 0 : index
      %c0_28 = arith.constant 0 : index
      %43 = vector.load %arg9[%c0_27, %c0_28] : memref<8x128xf32, #tpu.memory_space<vmem>>, vector<8x128xf32>
      tpu.vector_store %arg9[%c0_27, %c0_28], %42 {strides = array<i32>} : memref<8x128xf32, #tpu.memory_space<vmem>>, vector<8x128xf32>,
    } else {
    }
    return
  }
  func.func @transform_0(%arg0: i32, %arg1: i32) -> (i32, i32) {
    %c0_i32 = arith.constant 0 : i32
    return %arg0, %arg1 : i32, i32
  }
  func.func @transform_1(%arg0: i32, %arg1: i32) -> (i32, i32) {
    %c0_i32 = arith.constant 0 : i32
    %c0_i32_0 = arith.constant 0 : i32
    return %arg1, %c0_i32 : i32, i32
  }
  func.func @transform_2(%arg0: i32, %arg1: i32) -> (i32, i32) {
    %c0_i32 = arith.constant 0 : i32
    %c0_i32_0 = arith.constant 0 : i32
    %c0_i32_1 = arith.constant 0 : i32
    return %c0_i32, %c0_i32_0 : i32, i32
  }
  func.func @transform_3(%arg0: i32, %arg1: i32) -> (i32, i32) {
    %c0_i32 = arith.constant 0 : i32
    %c0_i32_0 = arith.constant 0 : i32
    %c0_i32_1 = arith.constant 0 : i32
    return %c0_i32, %c0_i32_0 : i32, i32
  }
  func.func @transform_4(%arg0: i32, %arg1: i32) -> (i32, i32) {
    %c0_i32 = arith.constant 0 : i32
    %c0_i32_0 = arith.constant 0 : i32
    %c0_i32_1 = arith.constant 0 : i32
    return %c0_i32, %c0_i32_0 : i32, i32
  }
  func.func @transform_5(%arg0: i32, %arg1: i32) -> (i32, i32) {
    %c0_i32 = arith.constant 0 : i32
    %c0_i32_0 = arith.constant 0 : i32
    %c0_i32_1 = arith.constant 0 : i32
    return %c0_i32, %c0_i32_0 : i32, i32
  }
  func.func @transform_6(%arg0: i32, %arg1: i32) -> (i32, i32) {
    %c0_i32 = arith.constant 0 : i32
    %c0_i32_0 = arith.constant 0 : i32
    %c0_i32_1 = arith.constant 0 : i32
    return %c0_i32, %c0_i32_0 : i32, i32
  }
  func.func @transform_7(%arg0: i32, %arg1: i32) -> (i32, i32) {
    %c0_i32 = arith.constant 0 : i32
    %c0_i32_0 = arith.constant 0 : i32
    return %arg0, %c0_i32 : i32, i32
  }
}

</mosaic_0001>

<llo_original>
// kernel: discriminator_forward.1
$region0: #{discriminator_forward.1}
  #allocation0 [shape = 'u32[]', space=smem, size = 0x4, offset = 0x4, fixed_abs, tag = 'smem constant byte address 0x4 - core index']
  #allocation1 [shape = 'u32[144,128]{1,0:T(1,128)}', space=vmem, size = 0x12000, scoped, tag = 'internal scratch']
  #allocation2 [shape = 'f32[8,512]{1,0:T(8,128)}', space=vmem, size = 0x4000, scoped, tag = 'scratch operand']
  #allocation3 [shape = 'f32[1,1]{1,0:T(1,128)S(1)}', space=vmem, size = 0x200, scoped, tag = 'scoped memory for discriminator_forward.1']
  %s0 = inlined_call_operand.vmem [shape: bf16[8,1024], index: 0, kind: input, shape index: {}]
  %s1 = inlined_call_operand.hbm [shape: bf16[1024,512], index: 1, kind: input, shape index: {}]
  %s2 = inlined_call_operand.vmem [shape: f32[1,512], index: 2, kind: input, shape index: {}]
  %s3 = inlined_call_operand.hbm [shape: bf16[512,256], index: 3, kind: input, shape index: {}]
  %s4 = inlined_call_operand.vmem [shape: f32[1,256], index: 4, kind: input, shape index: {}]
  %s5 = inlined_call_operand.vmem [shape: f32[1,256], index: 5, kind: input, shape index: {}]
  %s6 = inlined_call_operand.<no memory space> [shape: f32[1,1], index: 6, kind: input, shape index: {}]
  %s7 = inlined_call_operand.vmem [shape: f32[8,128], index: 7, kind: output, shape index: {}]
  %s8 = sld [smem:[#allocation0]]
  $region54: #{discriminator_forward.1} parent=0
    _
  %s10 = ssub.s32 1, %s8
  %s11 = scalar_select 0, %s10, %s8
  %v12 = vstv %s6
  %13 = vst [vmem:[#allocation3] sm:$0x1] %v12
  $region1: #{discriminator_forward.1} parent=0
    #allocation4 [shape = 'u8[1048576]{0}', space=vmem, size = 0x100000, scoped, tag = 'input window, operand 1, single buffered']
    #allocation5 [shape = 's32[1]{0}', space=sflag, size = 0x4, scoped, tag = 'scoped memory for discriminator_forward.1']
    #allocation6 [shape = 'u8[262144]{0}', space=vmem, size = 0x40000, scoped, tag = 'input window, operand 3, single buffered']
    #allocation7 [shape = 's32[1]{0}', space=sflag, size = 0x4, scoped, tag = 'scoped memory for discriminator_forward.1']
    %14 = vsyncpa [#allocation5], 0
    %15 = vsyncpa [#allocation7], 0
    // Predicated region
    $region2: #{discriminator_forward.1} parent=1 // pred_check
      _
    $region3: #{discriminator_forward.1} parent=1 // pred_check_branch
      %17 = sbr.rel (0) target = $region5
    $region4: #{discriminator_forward.1} parent=1 // pred_region
      _
    $region5: #{discriminator_forward.1} parent=1 // pred_fallthru
      _
    // Predicated region
    $region6: #{discriminator_forward.1} parent=1 // pred_check
      _
    $region7: #{discriminator_forward.1} parent=1 // pred_check_branch
      %19 = sbr.rel (0) target = $region9
    $region8: #{discriminator_forward.1} parent=1 // pred_region
      %s21 = ssub.s32 32768, 32768
      %22 = vsyncadd [#allocation5], %s21
      %s23 = sshll.u32 [#allocation4], 4
      %s24 = int_to_ptr.vmem [resolvable:$true] %s23
      %29 = dma.hbm_to_vmem [thread:$0]  %s1, 32768, %s24, [#allocation5], 256, 256, 16
    $region9: #{discriminator_forward.1} parent=1 // pred_fallthru
      _
    // Predicated region
    $region10: #{discriminator_forward.1} parent=1 // pred_check
      _
    $region11: #{discriminator_forward.1} parent=1 // pred_check_branch
      %31 = sbr.rel (0) target = $region13
    $region12: #{discriminator_forward.1} parent=1 // pred_region
      _
    $region13: #{discriminator_forward.1} parent=1 // pred_fallthru
      _
    // Predicated region
    $region14: #{discriminator_forward.1} parent=1 // pred_check
      _
    $region15: #{discriminator_forward.1} parent=1 // pred_check_branch
      %33 = sbr.rel (0) target = $region17
    $region16: #{discriminator_forward.1} parent=1 // pred_region
      %s35 = ssub.s32 8192, 8192
      %36 = vsyncadd [#allocation7], %s35
      %s37 = sshll.u32 [#allocation6], 4
      %s38 = int_to_ptr.vmem [resolvable:$true] %s37
      %43 = dma.hbm_to_vmem [thread:$0]  %s3, 8192, %s38, [#allocation7], 128, 128, 8
    $region17: #{discriminator_forward.1} parent=1 // pred_fallthru
      _
    // Predicated region
    $region18: #{discriminator_forward.1} parent=1 // pred_check
      _
    $region19: #{discriminator_forward.1} parent=1 // pred_check_branch
      %45 = sbr.rel (0) target = $region21
    $region20: #{discriminator_forward.1} parent=1 // pred_region
      _
    $region21: #{discriminator_forward.1} parent=1 // pred_fallthru
      _
    // Predicated region
    $region22: #{discriminator_forward.1} parent=1 // pred_check
      _
    $region23: #{discriminator_forward.1} parent=1 // pred_check_branch
      %47 = sbr.rel (0) target = $region25
    $region24: #{discriminator_forward.1} parent=1 // pred_region
      _
    $region25: #{discriminator_forward.1} parent=1 // pred_fallthru
      _
    // Predicated region
    $region26: #{discriminator_forward.1} parent=1 // pred_check
      _
    $region27: #{discriminator_forward.1} parent=1 // pred_check_branch
      %49 = sbr.rel (0) target = $region29
    $region28: #{discriminator_forward.1} parent=1 // pred_region
      _
    $region29: #{discriminator_forward.1} parent=1 // pred_fallthru
      _
    // Predicated region
    $region30: #{discriminator_forward.1} parent=1 // pred_check
      _
    $region31: #{discriminator_forward.1} parent=1 // pred_check_branch
      %51 = sbr.rel (0) target = $region33
    $region32: #{discriminator_forward.1} parent=1 // pred_region
      %52 = dma.done [#allocation5], 32768
    $region33: #{discriminator_forward.1} parent=1 // pred_fallthru
      _
    // Predicated region
    $region34: #{discriminator_forward.1} parent=1 // pred_check
      _
    $region35: #{discriminator_forward.1} parent=1 // pred_check_branch
      %54 = sbr.rel (0) target = $region37
    $region36: #{discriminator_forward.1} parent=1 // pred_region
      %55 = dma.done [#allocation7], 8192
    $region37: #{discriminator_forward.1} parent=1 // pred_fallthru
      _
    %p56 = scmp.eq.s32.totalorder 0, 0
    // Predicated region
    $region38: #{discriminator_forward.1} parent=1 // pred_check
      %p57 = pneg %p56
    $region39: #{discriminator_forward.1} parent=1 // pred_check_branch
      %59 = sbr.rel (%p57) target = $region41
    $region40: #{discriminator_forward.1} parent=1 // pred_region
      %60 = vst [vmem:[#allocation2] sm:$0xff] 0.0
      %61 = vst [vmem:[#allocation2 + $0x8] sm:$0xff] 0.0
      %62 = vst [vmem:[#allocation2 + $0x10] sm:$0xff] 0.0
      %63 = vst [vmem:[#allocation2 + $0x18] sm:$0xff] 0.0
    $region41: #{discriminator_forward.1} parent=1 // pred_fallthru
      _
    %v64 = vld [vmem:[#allocation2] sm:$0xff]
    %v65 = vld [vmem:[#allocation2 + $0x8] sm:$0xff]
    %v66 = vld [vmem:[#allocation2 + $0x10] sm:$0xff]
    %v67 = vld [vmem:[#allocation2 + $0x18] sm:$0xff]
    %v68 = vld [vmem:[%s0] sm:$0xff]
    %v69 = vld [vmem:[%s0 + $0x8] sm:$0xff]
    %v70 = vld [vmem:[%s0 + $0x10] sm:$0xff]
    %v71 = vld [vmem:[%s0 + $0x18] sm:$0xff]
    %v72 = vld [vmem:[#allocation4] sm:$0xff]
    %v73 = vld [vmem:[#allocation4 + $0x8] sm:$0xff]
    %v74 = vld [vmem:[#allocation4 + $0x10] sm:$0xff]
    %v75 = vld [vmem:[#allocation4 + $0x18] sm:$0xff]
    %v76 = vld [vmem:[#allocation4 + $0x20] sm:$0xff]
    %v77 = vld [vmem:[#allocation4 + $0x28] sm:$0xff]
    %v78 = vld [vmem:[#allocation4 + $0x30] sm:$0xff]
    %v79 = vld [vmem:[#allocation4 + $0x38] sm:$0xff]
    %v80 = vld [vmem:[#allocation4 + $0x40] sm:$0xff]
    %v81 = vld [vmem:[#allocation4 + $0x48] sm:$0xff]
    %v82 = vld [vmem:[#allocation4 + $0x50] sm:$0xff]
    %v83 = vld [vmem:[#allocation4 + $0x58] sm:$0xff]
    %v84 = vld [vmem:[#allocation4 + $0x60] sm:$0xff]
    %v85 = vld [vmem:[#allocation4 + $0x68] sm:$0xff]
    %v86 = vld [vmem:[#allocation4 + $0x70] sm:$0xff]
    %v87 = vld [vmem:[#allocation4 + $0x78] sm:$0xff]
    %v88 = vld [vmem:[#allocation4 + $0x80] sm:$0xff]
    %v89 = vld [vmem:[#allocation4 + $0x88] sm:$0xff]
    %v90 = vld [vmem:[#allocation4 + $0x90] sm:$0xff]
    %v91 = vld [vmem:[#allocation4 + $0x98] sm:$0xff]
    %v92 = vld [vmem:[#allocation4 + $0xa0] sm:$0xff]
    %v93 = vld [vmem:[#allocation4 + $0xa8] sm:$0xff]
    %v94 = vld [vmem:[#allocation4 + $0xb0] sm:$0xff]
    %v95 = vld [vmem:[#allocation4 + $0xb8] sm:$0xff]
    %v96 = vld [vmem:[#allocation4 + $0xc0] sm:$0xff]
    %v97 = vld [vmem:[#allocation4 + $0xc8] sm:$0xff]
    %v98 = vld [vmem:[#allocation4 + $0xd0] sm:$0xff]
    %v99 = vld [vmem:[#allocation4 + $0xd8] sm:$0xff]
    %v100 = vld [vmem:[#allocation4 + $0xe0] sm:$0xff]
    %v101 = vld [vmem:[#allocation4 + $0xe8] sm:$0xff]
    %v102 = vld [vmem:[#allocation4 + $0xf0] sm:$0xff]
    %v103 = vld [vmem:[#allocation4 + $0xf8] sm:$0xff]
    %v104 = vld [vmem:[#allocation4 + $0x100] sm:$0xff]
    %v105 = vld [vmem:[#allocation4 + $0x108] sm:$0xff]
    %v106 = vld [vmem:[#allocation4 + $0x110] sm:$0xff]
    %v107 = vld [vmem:[#allocation4 + $0x118] sm:$0xff]
    %v108 = vld [vmem:[#allocation4 + $0x120] sm:$0xff]
    %v109 = vld [vmem:[#allocation4 + $0x128] sm:$0xff]
    %v110 = vld [vmem:[#allocation4 + $0x130] sm:$0xff]
    %v111 = vld [vmem:[#allocation4 + $0x138] sm:$0xff]
    %v112 = vld [vmem:[#allocation4 + $0x140] sm:$0xff]
    %v113 = vld [vmem:[#allocation4 + $0x148] sm:$0xff]
    %v114 = vld [vmem:[#allocation4 + $0x150] sm:$0xff]
    %v115 = vld [vmem:[#allocation4 + $0x158] sm:$0xff]
    %v116 = vld [vmem:[#allocation4 + $0x160] sm:$0xff]
    %v117 = vld [vmem:[#allocation4 + $0x168] sm:$0xff]
    %v118 = vld [vmem:[#allocation4 + $0x170] sm:$0xff]
    %v119 = vld [vmem:[#allocation4 + $0x178] sm:$0xff]
    %v120 = vld [vmem:[#allocation4 + $0x180] sm:$0xff]
    %v121 = vld [vmem:[#allocation4 + $0x188] sm:$0xff]
    %v122 = vld [vmem:[#allocation4 + $0x190] sm:$0xff]
    %v123 = vld [vmem:[#allocation4 + $0x198] sm:$0xff]
    %v124 = vld [vmem:[#allocation4 + $0x1a0] sm:$0xff]
    %v125 = vld [vmem:[#allocation4 + $0x1a8] sm:$0xff]
    %v126 = vld [vmem:[#allocation4 + $0x1b0] sm:$0xff]
    %v127 = vld [vmem:[#allocation4 + $0x1b8] sm:$0xff]
    %v128 = vld [vmem:[#allocation4 + $0x1c0] sm:$0xff]
    %v129 = vld [vmem:[#allocation4 + $0x1c8] sm:$0xff]
    %v130 = vld [vmem:[#allocation4 + $0x1d0] sm:$0xff]
    %v131 = vld [vmem:[#allocation4 + $0x1d8] sm:$0xff]
    %v132 = vld [vmem:[#allocation4 + $0x1e0] sm:$0xff]
    %v133 = vld [vmem:[#allocation4 + $0x1e8] sm:$0xff]
    %v134 = vld [vmem:[#allocation4 + $0x1f0] sm:$0xff]
    %v135 = vld [vmem:[#allocation4 + $0x1f8] sm:$0xff]
    %v136 = vld [vmem:[#allocation4 + $0x200] sm:$0xff]
    %v137 = vld [vmem:[#allocation4 + $0x208] sm:$0xff]
    %v138 = vld [vmem:[#allocation4 + $0x210] sm:$0xff]
    %v139 = vld [vmem:[#allocation4 + $0x218] sm:$0xff]
    %v140 = vld [vmem:[#allocation4 + $0x220] sm:$0xff]
    %v141 = vld [vmem:[#allocation4 + $0x228] sm:$0xff]
    %v142 = vld [vmem:[#allocation4 + $0x230] sm:$0xff]
    %v143 = vld [vmem:[#allocation4 + $0x238] sm:$0xff]
    %v144 = vld [vmem:[#allocation4 + $0x240] sm:$0xff]
    %v145 = vld [vmem:[#allocation4 + $0x248] sm:$0xff]
    %v146 = vld [vmem:[#allocation4 + $0x250] sm:$0xff]
    %v147 = vld [vmem:[#allocation4 + $0x258] sm:$0xff]
    %v148 = vld [vmem:[#allocation4 + $0x260] sm:$0xff]
    %v149 = vld [vmem:[#allocation4 + $0x268] sm:$0xff]
    %v150 = vld [vmem:[#allocation4 + $0x270] sm:$0xff]
    %v151 = vld [vmem:[#allocation4 + $0x278] sm:$0xff]
    %v152 = vld [vmem:[#allocation4 + $0x280] sm:$0xff]
    %v153 = vld [vmem:[#allocation4 + $0x288] sm:$0xff]
    %v154 = vld [vmem:[#allocation4 + $0x290] sm:$0xff]
    %v155 = vld [vmem:[#allocation4 + $0x298] sm:$0xff]
    %v156 = vld [vmem:[#allocation4 + $0x2a0] sm:$0xff]
    %v157 = vld [vmem:[#allocation4 + $0x2a8] sm:$0xff]
    %v158 = vld [vmem:[#allocation4 + $0x2b0] sm:$0xff]
    %v159 = vld [vmem:[#allocation4 + $0x2b8] sm:$0xff]
    %v160 = vld [vmem:[#allocation4 + $0x2c0] sm:$0xff]
    %v161 = vld [vmem:[#allocation4 + $0x2c8] sm:$0xff]
    %v162 = vld [vmem:[#allocation4 + $0x2d0] sm:$0xff]
    %v163 = vld [vmem:[#allocation4 + $0x2d8] sm:$0xff]
    %v164 = vld [vmem:[#allocation4 + $0x2e0] sm:$0xff]
    %v165 = vld [vmem:[#allocation4 + $0x2e8] sm:$0xff]
    %v166 = vld [vmem:[#allocation4 + $0x2f0] sm:$0xff]
    %v167 = vld [vmem:[#allocation4 + $0x2f8] sm:$0xff]
    %v168 = vld [vmem:[#allocation4 + $0x300] sm:$0xff]
    %v169 = vld [vmem:[#allocation4 + $0x308] sm:$0xff]
    %v170 = vld [vmem:[#allocation4 + $0x310] sm:$0xff]
    %v171 = vld [vmem:[#allocation4 + $0x318] sm:$0xff]
    %v172 = vld [vmem:[#allocation4 + $0x320] sm:$0xff]
    %v173 = vld [vmem:[#allocation4 + $0x328] sm:$0xff]
    %v174 = vld [vmem:[#allocation4 + $0x330] sm:$0xff]
    %v175 = vld [vmem:[#allocation4 + $0x338] sm:$0xff]
    %v176 = vld [vmem:[#allocation4 + $0x340] sm:$0xff]
    %v177 = vld [vmem:[#allocation4 + $0x348] sm:$0xff]
    %v178 = vld [vmem:[#allocation4 + $0x350] sm:$0xff]
    %v179 = vld [vmem:[#allocation4 + $0x358] sm:$0xff]
    %v180 = vld [vmem:[#allocation4 + $0x360] sm:$0xff]
    %v181 = vld [vmem:[#allocation4 + $0x368] sm:$0xff]
    %v182 = vld [vmem:[#allocation4 + $0x370] sm:$0xff]
    %v183 = vld [vmem:[#allocation4 + $0x378] sm:$0xff]
    %v184 = vld [vmem:[#allocation4 + $0x380] sm:$0xff]
    %v185 = vld [vmem:[#allocation4 + $0x388] sm:$0xff]
    %v186 = vld [vmem:[#allocation4 + $0x390] sm:$0xff]
    %v187 = vld [vmem:[#allocation4 + $0x398] sm:$0xff]
    %v188 = vld [vmem:[#allocation4 + $0x3a0] sm:$0xff]
    %v189 = vld [vmem:[#allocation4 + $0x3a8] sm:$0xff]
    %v190 = vld [vmem:[#allocation4 + $0x3b0] sm:$0xff]
    %v191 = vld [vmem:[#allocation4 + $0x3b8] sm:$0xff]
    %v192 = vld [vmem:[#allocation4 + $0x3c0] sm:$0xff]
    %v193 = vld [vmem:[#allocation4 + $0x3c8] sm:$0xff]
    %v194 = vld [vmem:[#allocation4 + $0x3d0] sm:$0xff]
    %v195 = vld [vmem:[#allocation4 + $0x3d8] sm:$0xff]
    %v196 = vld [vmem:[#allocation4 + $0x3e0] sm:$0xff]
    %v197 = vld [vmem:[#allocation4 + $0x3e8] sm:$0xff]
    %v198 = vld [vmem:[#allocation4 + $0x3f0] sm:$0xff]
    %v199 = vld [vmem:[#allocation4 + $0x3f8] sm:$0xff]
    %v200 = vld [vmem:[#allocation4 + $0x400] sm:$0xff]
    %v201 = vld [vmem:[#allocation4 + $0x408] sm:$0xff]
    %v202 = vld [vmem:[#allocation4 + $0x410] sm:$0xff]
    %v203 = vld [vmem:[#allocation4 + $0x418] sm:$0xff]
    %v204 = vld [vmem:[#allocation4 + $0x420] sm:$0xff]
    %v205 = vld [vmem:[#allocation4 + $0x428] sm:$0xff]
    %v206 = vld [vmem:[#allocation4 + $0x430] sm:$0xff]
    %v207 = vld [vmem:[#allocation4 + $0x438] sm:$0xff]
    %v208 = vld [vmem:[#allocation4 + $0x440] sm:$0xff]
    %v209 = vld [vmem:[#allocation4 + $0x448] sm:$0xff]
    %v210 = vld [vmem:[#allocation4 + $0x450] sm:$0xff]
    %v211 = vld [vmem:[#allocation4 + $0x458] sm:$0xff]
    %v212 = vld [vmem:[#allocation4 + $0x460] sm:$0xff]
    %v213 = vld [vmem:[#allocation4 + $0x468] sm:$0xff]
    %v214 = vld [vmem:[#allocation4 + $0x470] sm:$0xff]
    %v215 = vld [vmem:[#allocation4 + $0x478] sm:$0xff]
    %v216 = vld [vmem:[#allocation4 + $0x480] sm:$0xff]
    %v217 = vld [vmem:[#allocation4 + $0x488] sm:$0xff]
    %v218 = vld [vmem:[#allocation4 + $0x490] sm:$0xff]
    %v219 = vld [vmem:[#allocation4 + $0x498] sm:$0xff]
    %v220 = vld [vmem:[#allocation4 + $0x4a0] sm:$0xff]
    %v221 = vld [vmem:[#allocation4 + $0x4a8] sm:$0xff]
    %v222 = vld [vmem:[#allocation4 + $0x4b0] sm:$0xff]
    %v223 = vld [vmem:[#allocation4 + $0x4b8] sm:$0xff]
    %v224 = vld [vmem:[#allocation4 + $0x4c0] sm:$0xff]
    %v225 = vld [vmem:[#allocation4 + $0x4c8] sm:$0xff]
    %v226 = vld [vmem:[#allocation4 + $0x4d0] sm:$0xff]
    %v227 = vld [vmem:[#allocation4 + $0x4d8] sm:$0xff]
    %v228 = vld [vmem:[#allocation4 + $0x4e0] sm:$0xff]
    %v229 = vld [vmem:[#allocation4 + $0x4e8] sm:$0xff]
    %v230 = vld [vmem:[#allocation4 + $0x4f0] sm:$0xff]
    %v231 = vld [vmem:[#allocation4 + $0x4f8] sm:$0xff]
    %v232 = vld [vmem:[#allocation4 + $0x500] sm:$0xff]
    %v233 = vld [vmem:[#allocation4 + $0x508] sm:$0xff]
    %v234 = vld [vmem:[#allocation4 + $0x510] sm:$0xff]
    %v235 = vld [vmem:[#allocation4 + $0x518] sm:$0xff]
    %v236 = vld [vmem:[#allocation4 + $0x520] sm:$0xff]
    %v237 = vld [vmem:[#allocation4 + $0x528] sm:$0xff]
    %v238 = vld [vmem:[#allocation4 + $0x530] sm:$0xff]
    %v239 = vld [vmem:[#allocation4 + $0x538] sm:$0xff]
    %v240 = vld [vmem:[#allocation4 + $0x540] sm:$0xff]
    %v241 = vld [vmem:[#allocation4 + $0x548] sm:$0xff]
    %v242 = vld [vmem:[#allocation4 + $0x550] sm:$0xff]
    %v243 = vld [vmem:[#allocation4 + $0x558] sm:$0xff]
    %v244 = vld [vmem:[#allocation4 + $0x560] sm:$0xff]
    %v245 = vld [vmem:[#allocation4 + $0x568] sm:$0xff]
    %v246 = vld [vmem:[#allocation4 + $0x570] sm:$0xff]
    %v247 = vld [vmem:[#allocation4 + $0x578] sm:$0xff]
    %v248 = vld [vmem:[#allocation4 + $0x580] sm:$0xff]
    %v249 = vld [vmem:[#allocation4 + $0x588] sm:$0xff]
    %v250 = vld [vmem:[#allocation4 + $0x590] sm:$0xff]
    %v251 = vld [vmem:[#allocation4 + $0x598] sm:$0xff]
    %v252 = vld [vmem:[#allocation4 + $0x5a0] sm:$0xff]
    %v253 = vld [vmem:[#allocation4 + $0x5a8] sm:$0xff]
    %v254 = vld [vmem:[#allocation4 + $0x5b0] sm:$0xff]
    %v255 = vld [vmem:[#allocation4 + $0x5b8] sm:$0xff]
    %v256 = vld [vmem:[#allocation4 + $0x5c0] sm:$0xff]
    %v257 = vld [vmem:[#allocation4 + $0x5c8] sm:$0xff]
    %v258 = vld [vmem:[#allocation4 + $0x5d0] sm:$0xff]
    %v259 = vld [vmem:[#allocation4 + $0x5d8] sm:$0xff]
    %v260 = vld [vmem:[#allocation4 + $0x5e0] sm:$0xff]
    %v261 = vld [vmem:[#allocation4 + $0x5e8] sm:$0xff]
    %v262 = vld [vmem:[#allocation4 + $0x5f0] sm:$0xff]
    %v263 = vld [vmem:[#allocation4 + $0x5f8] sm:$0xff]
    %v264 = vld [vmem:[#allocation4 + $0x600] sm:$0xff]
    %v265 = vld [vmem:[#allocation4 + $0x608] sm:$0xff]
    %v266 = vld [vmem:[#allocation4 + $0x610] sm:$0xff]
    %v267 = vld [vmem:[#allocation4 + $0x618] sm:$0xff]
    %v268 = vld [vmem:[#allocation4 + $0x620] sm:$0xff]
    %v269 = vld [vmem:[#allocation4 + $0x628] sm:$0xff]
    %v270 = vld [vmem:[#allocation4 + $0x630] sm:$0xff]
    %v271 = vld [vmem:[#allocation4 + $0x638] sm:$0xff]
    %v272 = vld [vmem:[#allocation4 + $0x640] sm:$0xff]
    %v273 = vld [vmem:[#allocation4 + $0x648] sm:$0xff]
    %v274 = vld [vmem:[#allocation4 + $0x650] sm:$0xff]
    %v275 = vld [vmem:[#allocation4 + $0x658] sm:$0xff]
    %v276 = vld [vmem:[#allocation4 + $0x660] sm:$0xff]
    %v277 = vld [vmem:[#allocation4 + $0x668] sm:$0xff]
    %v278 = vld [vmem:[#allocation4 + $0x670] sm:$0xff]
    %v279 = vld [vmem:[#allocation4 + $0x678] sm:$0xff]
    %v280 = vld [vmem:[#allocation4 + $0x680] sm:$0xff]
    %v281 = vld [vmem:[#allocation4 + $0x688] sm:$0xff]
    %v282 = vld [vmem:[#allocation4 + $0x690] sm:$0xff]
    %v283 = vld [vmem:[#allocation4 + $0x698] sm:$0xff]
    %v284 = vld [vmem:[#allocation4 + $0x6a0] sm:$0xff]
    %v285 = vld [vmem:[#allocation4 + $0x6a8] sm:$0xff]
    %v286 = vld [vmem:[#allocation4 + $0x6b0] sm:$0xff]
    %v287 = vld [vmem:[#allocation4 + $0x6b8] sm:$0xff]
    %v288 = vld [vmem:[#allocation4 + $0x6c0] sm:$0xff]
    %v289 = vld [vmem:[#allocation4 + $0x6c8] sm:$0xff]
    %v290 = vld [vmem:[#allocation4 + $0x6d0] sm:$0xff]
    %v291 = vld [vmem:[#allocation4 + $0x6d8] sm:$0xff]
    %v292 = vld [vmem:[#allocation4 + $0x6e0] sm:$0xff]
    %v293 = vld [vmem:[#allocation4 + $0x6e8] sm:$0xff]
    %v294 = vld [vmem:[#allocation4 + $0x6f0] sm:$0xff]
    %v295 = vld [vmem:[#allocation4 + $0x6f8] sm:$0xff]
    %v296 = vld [vmem:[#allocation4 + $0x700] sm:$0xff]
    %v297 = vld [vmem:[#allocation4 + $0x708] sm:$0xff]
    %v298 = vld [vmem:[#allocation4 + $0x710] sm:$0xff]
    %v299 = vld [vmem:[#allocation4 + $0x718] sm:$0xff]
    %v300 = vld [vmem:[#allocation4 + $0x720] sm:$0xff]
    %v301 = vld [vmem:[#allocation4 + $0x728] sm:$0xff]
    %v302 = vld [vmem:[#allocation4 + $0x730] sm:$0xff]
    %v303 = vld [vmem:[#allocation4 + $0x738] sm:$0xff]
    %v304 = vld [vmem:[#allocation4 + $0x740] sm:$0xff]
    %v305 = vld [vmem:[#allocation4 + $0x748] sm:$0xff]
    %v306 = vld [vmem:[#allocation4 + $0x750] sm:$0xff]
    %v307 = vld [vmem:[#allocation4 + $0x758] sm:$0xff]
    %v308 = vld [vmem:[#allocation4 + $0x760] sm:$0xff]
    %v309 = vld [vmem:[#allocation4 + $0x768] sm:$0xff]
    %v310 = vld [vmem:[#allocation4 + $0x770] sm:$0xff]
    %v311 = vld [vmem:[#allocation4 + $0x778] sm:$0xff]
    %v312 = vld [vmem:[#allocation4 + $0x780] sm:$0xff]
    %v313 = vld [vmem:[#allocation4 + $0x788] sm:$0xff]
    %v314 = vld [vmem:[#allocation4 + $0x790] sm:$0xff]
    %v315 = vld [vmem:[#allocation4 + $0x798] sm:$0xff]
    %v316 = vld [vmem:[#allocation4 + $0x7a0] sm:$0xff]
    %v317 = vld [vmem:[#allocation4 + $0x7a8] sm:$0xff]
    %v318 = vld [vmem:[#allocation4 + $0x7b0] sm:$0xff]
    %v319 = vld [vmem:[#allocation4 + $0x7b8] sm:$0xff]
    %v320 = vld [vmem:[#allocation4 + $0x7c0] sm:$0xff]
    %v321 = vld [vmem:[#allocation4 + $0x7c8] sm:$0xff]
    %v322 = vld [vmem:[#allocation4 + $0x7d0] sm:$0xff]
    %v323 = vld [vmem:[#allocation4 + $0x7d8] sm:$0xff]
    %v324 = vld [vmem:[#allocation4 + $0x7e0] sm:$0xff]
    %v325 = vld [vmem:[#allocation4 + $0x7e8] sm:$0xff]
    %v326 = vld [vmem:[#allocation4 + $0x7f0] sm:$0xff]
    %v327 = vld [vmem:[#allocation4 + $0x7f8] sm:$0xff]
    %v332 = vunpack.c.l.b16 %v68
    %v333 = vunpack.c.h.b16 %v68
    %v334 = vunpack.c.l.b16 %v69
    %v335 = vunpack.c.h.b16 %v69
    %v336 = vunpack.c.l.b16 %v70
    %v337 = vunpack.c.h.b16 %v70
    %v338 = vunpack.c.l.b16 %v71
    %v339 = vunpack.c.h.b16 %v71
    %v340 = vpack.c.b16 %v332, %v332
    %v341 = vpack.c.b16 %v333, %v333
    %v342 = vpack.c.b16 %v334, %v334
    %v343 = vpack.c.b16 %v335, %v335
    %v344 = vpack.c.b16 %v336, %v336
    %v345 = vpack.c.b16 %v337, %v337
    %v346 = vpack.c.b16 %v338, %v338
    %v347 = vpack.c.b16 %v339, %v339
    %v612 = vunpack.c.l.b16 %v72
    %v613 = vunpack.c.h.b16 %v72
    %v614 = vunpack.c.l.b16 %v73
    %v615 = vunpack.c.h.b16 %v73
    %v616 = vunpack.c.l.b16 %v74
    %v617 = vunpack.c.h.b16 %v74
    %v618 = vunpack.c.l.b16 %v75
    %v619 = vunpack.c.h.b16 %v75
    %v620 = vunpack.c.l.b16 %v76
    %v621 = vunpack.c.h.b16 %v76
    %v622 = vunpack.c.l.b16 %v77
    %v623 = vunpack.c.h.b16 %v77
    %v624 = vunpack.c.l.b16 %v78
    %v625 = vunpack.c.h.b16 %v78
    %v626 = vunpack.c.l.b16 %v79
    %v627 = vunpack.c.h.b16 %v79
    %v628 = vunpack.c.l.b16 %v80
    %v629 = vunpack.c.h.b16 %v80
    %v630 = vunpack.c.l.b16 %v81
    %v631 = vunpack.c.h.b16 %v81
    %v632 = vunpack.c.l.b16 %v82
    %v633 = vunpack.c.h.b16 %v82
    %v634 = vunpack.c.l.b16 %v83
    %v635 = vunpack.c.h.b16 %v83
    %v636 = vunpack.c.l.b16 %v84
    %v637 = vunpack.c.h.b16 %v84
    %v638 = vunpack.c.l.b16 %v85
    %v639 = vunpack.c.h.b16 %v85
    %v640 = vunpack.c.l.b16 %v86
    %v641 = vunpack.c.h.b16 %v86
    %v642 = vunpack.c.l.b16 %v87
    %v643 = vunpack.c.h.b16 %v87
    %v644 = vunpack.c.l.b16 %v88
    %v645 = vunpack.c.h.b16 %v88
    %v646 = vunpack.c.l.b16 %v89
    %v647 = vunpack.c.h.b16 %v89
    %v648 = vunpack.c.l.b16 %v90
    %v649 = vunpack.c.h.b16 %v90
    %v650 = vunpack.c.l.b16 %v91
    %v651 = vunpack.c.h.b16 %v91
    %v652 = vunpack.c.l.b16 %v92
    %v653 = vunpack.c.h.b16 %v92
    %v654 = vunpack.c.l.b16 %v93
    %v655 = vunpack.c.h.b16 %v93
    %v656 = vunpack.c.l.b16 %v94
    %v657 = vunpack.c.h.b16 %v94
    %v658 = vunpack.c.l.b16 %v95
    %v659 = vunpack.c.h.b16 %v95
    %v660 = vunpack.c.l.b16 %v96
    %v661 = vunpack.c.h.b16 %v96
    %v662 = vunpack.c.l.b16 %v97
    %v663 = vunpack.c.h.b16 %v97
    %v664 = vunpack.c.l.b16 %v98
    %v665 = vunpack.c.h.b16 %v98
    %v666 = vunpack.c.l.b16 %v99
    %v667 = vunpack.c.h.b16 %v99
    %v668 = vunpack.c.l.b16 %v100
    %v669 = vunpack.c.h.b16 %v100
    %v670 = vunpack.c.l.b16 %v101
    %v671 = vunpack.c.h.b16 %v101
    %v672 = vunpack.c.l.b16 %v102
    %v673 = vunpack.c.h.b16 %v102
    %v674 = vunpack.c.l.b16 %v103
    %v675 = vunpack.c.h.b16 %v103
    %v676 = vunpack.c.l.b16 %v104
    %v677 = vunpack.c.h.b16 %v104
    %v678 = vunpack.c.l.b16 %v105
    %v679 = vunpack.c.h.b16 %v105
    %v680 = vunpack.c.l.b16 %v106
    %v681 = vunpack.c.h.b16 %v106
    %v682 = vunpack.c.l.b16 %v107
    %v683 = vunpack.c.h.b16 %v107
    %v684 = vunpack.c.l.b16 %v108
    %v685 = vunpack.c.h.b16 %v108
    %v686 = vunpack.c.l.b16 %v109
    %v687 = vunpack.c.h.b16 %v109
    %v688 = vunpack.c.l.b16 %v110
    %v689 = vunpack.c.h.b16 %v110
    %v690 = vunpack.c.l.b16 %v111
    %v691 = vunpack.c.h.b16 %v111
    %v692 = vunpack.c.l.b16 %v112
    %v693 = vunpack.c.h.b16 %v112
    %v694 = vunpack.c.l.b16 %v113
    %v695 = vunpack.c.h.b16 %v113
    %v696 = vunpack.c.l.b16 %v114
    %v697 = vunpack.c.h.b16 %v114
    %v698 = vunpack.c.l.b16 %v115
    %v699 = vunpack.c.h.b16 %v115
    %v700 = vunpack.c.l.b16 %v116
    %v701 = vunpack.c.h.b16 %v116
    %v702 = vunpack.c.l.b16 %v117
    %v703 = vunpack.c.h.b16 %v117
    %v704 = vunpack.c.l.b16 %v118
    %v705 = vunpack.c.h.b16 %v118
    %v706 = vunpack.c.l.b16 %v119
    %v707 = vunpack.c.h.b16 %v119
    %v708 = vunpack.c.l.b16 %v120
    %v709 = vunpack.c.h.b16 %v120
    %v710 = vunpack.c.l.b16 %v121
    %v711 = vunpack.c.h.b16 %v121
    %v712 = vunpack.c.l.b16 %v122
    %v713 = vunpack.c.h.b16 %v122
    %v714 = vunpack.c.l.b16 %v123
    %v715 = vunpack.c.h.b16 %v123
    %v716 = vunpack.c.l.b16 %v124
    %v717 = vunpack.c.h.b16 %v124
    %v718 = vunpack.c.l.b16 %v125
    %v719 = vunpack.c.h.b16 %v125
    %v720 = vunpack.c.l.b16 %v126
    %v721 = vunpack.c.h.b16 %v126
    %v722 = vunpack.c.l.b16 %v127
    %v723 = vunpack.c.h.b16 %v127
    %v724 = vunpack.c.l.b16 %v128
    %v725 = vunpack.c.h.b16 %v128
    %v726 = vunpack.c.l.b16 %v129
    %v727 = vunpack.c.h.b16 %v129
    %v728 = vunpack.c.l.b16 %v130
    %v729 = vunpack.c.h.b16 %v130
    %v730 = vunpack.c.l.b16 %v131
    %v731 = vunpack.c.h.b16 %v131
    %v732 = vunpack.c.l.b16 %v132
    %v733 = vunpack.c.h.b16 %v132
    %v734 = vunpack.c.l.b16 %v133
    %v735 = vunpack.c.h.b16 %v133
    %v736 = vunpack.c.l.b16 %v134
    %v737 = vunpack.c.h.b16 %v134
    %v738 = vunpack.c.l.b16 %v135
    %v739 = vunpack.c.h.b16 %v135
    %v740 = vunpack.c.l.b16 %v136
    %v741 = vunpack.c.h.b16 %v136
    %v742 = vunpack.c.l.b16 %v137
    %v743 = vunpack.c.h.b16 %v137
    %v744 = vunpack.c.l.b16 %v138
    %v745 = vunpack.c.h.b16 %v138
    %v746 = vunpack.c.l.b16 %v139
    %v747 = vunpack.c.h.b16 %v139
    %v748 = vunpack.c.l.b16 %v140
    %v749 = vunpack.c.h.b16 %v140
    %v750 = vunpack.c.l.b16 %v141
    %v751 = vunpack.c.h.b16 %v141
    %v752 = vunpack.c.l.b16 %v142
    %v753 = vunpack.c.h.b16 %v142
    %v754 = vunpack.c.l.b16 %v143
    %v755 = vunpack.c.h.b16 %v143
    %v756 = vunpack.c.l.b16 %v144
    %v757 = vunpack.c.h.b16 %v144
    %v758 = vunpack.c.l.b16 %v145
    %v759 = vunpack.c.h.b16 %v145
    %v760 = vunpack.c.l.b16 %v146
    %v761 = vunpack.c.h.b16 %v146
    %v762 = vunpack.c.l.b16 %v147
    %v763 = vunpack.c.h.b16 %v147
    %v764 = vunpack.c.l.b16 %v148
    %v765 = vunpack.c.h.b16 %v148
    %v766 = vunpack.c.l.b16 %v149
    %v767 = vunpack.c.h.b16 %v149
    %v768 = vunpack.c.l.b16 %v150
    %v769 = vunpack.c.h.b16 %v150
    %v770 = vunpack.c.l.b16 %v151
    %v771 = vunpack.c.h.b16 %v151
    %v772 = vunpack.c.l.b16 %v152
    %v773 = vunpack.c.h.b16 %v152
    %v774 = vunpack.c.l.b16 %v153
    %v775 = vunpack.c.h.b16 %v153
    %v776 = vunpack.c.l.b16 %v154
    %v777 = vunpack.c.h.b16 %v154
    %v778 = vunpack.c.l.b16 %v155
    %v779 = vunpack.c.h.b16 %v155
    %v780 = vunpack.c.l.b16 %v156
    %v781 = vunpack.c.h.b16 %v156
    %v782 = vunpack.c.l.b16 %v157
    %v783 = vunpack.c.h.b16 %v157
    %v784 = vunpack.c.l.b16 %v158
    %v785 = vunpack.c.h.b16 %v158
    %v786 = vunpack.c.l.b16 %v159
    %v787 = vunpack.c.h.b16 %v159
    %v788 = vunpack.c.l.b16 %v160
    %v789 = vunpack.c.h.b16 %v160
    %v790 = vunpack.c.l.b16 %v161
    %v791 = vunpack.c.h.b16 %v161
    %v792 = vunpack.c.l.b16 %v162
    %v793 = vunpack.c.h.b16 %v162
    %v794 = vunpack.c.l.b16 %v163
    %v795 = vunpack.c.h.b16 %v163
    %v796 = vunpack.c.l.b16 %v164
    %v797 = vunpack.c.h.b16 %v164
    %v798 = vunpack.c.l.b16 %v165
    %v799 = vunpack.c.h.b16 %v165
    %v800 = vunpack.c.l.b16 %v166
    %v801 = vunpack.c.h.b16 %v166
    %v802 = vunpack.c.l.b16 %v167
    %v803 = vunpack.c.h.b16 %v167
    %v804 = vunpack.c.l.b16 %v168
    %v805 = vunpack.c.h.b16 %v168
    %v806 = vunpack.c.l.b16 %v169
    %v807 = vunpack.c.h.b16 %v169
    %v808 = vunpack.c.l.b16 %v170
    %v809 = vunpack.c.h.b16 %v170
    %v810 = vunpack.c.l.b16 %v171
    %v811 = vunpack.c.h.b16 %v171
    %v812 = vunpack.c.l.b16 %v172
    %v813 = vunpack.c.h.b16 %v172
    %v814 = vunpack.c.l.b16 %v173
    %v815 = vunpack.c.h.b16 %v173
    %v816 = vunpack.c.l.b16 %v174
    %v817 = vunpack.c.h.b16 %v174
    %v818 = vunpack.c.l.b16 %v175
    %v819 = vunpack.c.h.b16 %v175
    %v820 = vunpack.c.l.b16 %v176
    %v821 = vunpack.c.h.b16 %v176
    %v822 = vunpack.c.l.b16 %v177
    %v823 = vunpack.c.h.b16 %v177
    %v824 = vunpack.c.l.b16 %v178
    %v825 = vunpack.c.h.b16 %v178
    %v826 = vunpack.c.l.b16 %v179
    %v827 = vunpack.c.h.b16 %v179
    %v828 = vunpack.c.l.b16 %v180
    %v829 = vunpack.c.h.b16 %v180
    %v830 = vunpack.c.l.b16 %v181
    %v831 = vunpack.c.h.b16 %v181
    %v832 = vunpack.c.l.b16 %v182
    %v833 = vunpack.c.h.b16 %v182
    %v834 = vunpack.c.l.b16 %v183
    %v835 = vunpack.c.h.b16 %v183
    %v836 = vunpack.c.l.b16 %v184
    %v837 = vunpack.c.h.b16 %v184
    %v838 = vunpack.c.l.b16 %v185
    %v839 = vunpack.c.h.b16 %v185
    %v840 = vunpack.c.l.b16 %v186
    %v841 = vunpack.c.h.b16 %v186
    %v842 = vunpack.c.l.b16 %v187
    %v843 = vunpack.c.h.b16 %v187
    %v844 = vunpack.c.l.b16 %v188
    %v845 = vunpack.c.h.b16 %v188
    %v846 = vunpack.c.l.b16 %v189
    %v847 = vunpack.c.h.b16 %v189
    %v848 = vunpack.c.l.b16 %v190
    %v849 = vunpack.c.h.b16 %v190
    %v850 = vunpack.c.l.b16 %v191
    %v851 = vunpack.c.h.b16 %v191
    %v852 = vunpack.c.l.b16 %v192
    %v853 = vunpack.c.h.b16 %v192
    %v854 = vunpack.c.l.b16 %v193
    %v855 = vunpack.c.h.b16 %v193
    %v856 = vunpack.c.l.b16 %v194
    %v857 = vunpack.c.h.b16 %v194
    %v858 = vunpack.c.l.b16 %v195
    %v859 = vunpack.c.h.b16 %v195
    %v860 = vunpack.c.l.b16 %v196
    %v861 = vunpack.c.h.b16 %v196
    %v862 = vunpack.c.l.b16 %v197
    %v863 = vunpack.c.h.b16 %v197
    %v864 = vunpack.c.l.b16 %v198
    %v865 = vunpack.c.h.b16 %v198
    %v866 = vunpack.c.l.b16 %v199
    %v867 = vunpack.c.h.b16 %v199
    %v868 = vunpack.c.l.b16 %v200
    %v869 = vunpack.c.h.b16 %v200
    %v870 = vunpack.c.l.b16 %v201
    %v871 = vunpack.c.h.b16 %v201
    %v872 = vunpack.c.l.b16 %v202
    %v873 = vunpack.c.h.b16 %v202
    %v874 = vunpack.c.l.b16 %v203
    %v875 = vunpack.c.h.b16 %v203
    %v876 = vunpack.c.l.b16 %v204
    %v877 = vunpack.c.h.b16 %v204
    %v878 = vunpack.c.l.b16 %v205
    %v879 = vunpack.c.h.b16 %v205
    %v880 = vunpack.c.l.b16 %v206
    %v881 = vunpack.c.h.b16 %v206
    %v882 = vunpack.c.l.b16 %v207
    %v883 = vunpack.c.h.b16 %v207
    %v884 = vunpack.c.l.b16 %v208
    %v885 = vunpack.c.h.b16 %v208
    %v886 = vunpack.c.l.b16 %v209
    %v887 = vunpack.c.h.b16 %v209
    %v888 = vunpack.c.l.b16 %v210
    %v889 = vunpack.c.h.b16 %v210
    %v890 = vunpack.c.l.b16 %v211
    %v891 = vunpack.c.h.b16 %v211
    %v892 = vunpack.c.l.b16 %v212
    %v893 = vunpack.c.h.b16 %v212
    %v894 = vunpack.c.l.b16 %v213
    %v895 = vunpack.c.h.b16 %v213
    %v896 = vunpack.c.l.b16 %v214
    %v897 = vunpack.c.h.b16 %v214
    %v898 = vunpack.c.l.b16 %v215
    %v899 = vunpack.c.h.b16 %v215
    %v900 = vunpack.c.l.b16 %v216
    %v901 = vunpack.c.h.b16 %v216
    %v902 = vunpack.c.l.b16 %v217
    %v903 = vunpack.c.h.b16 %v217
    %v904 = vunpack.c.l.b16 %v218
    %v905 = vunpack.c.h.b16 %v218
    %v906 = vunpack.c.l.b16 %v219
    %v907 = vunpack.c.h.b16 %v219
    %v908 = vunpack.c.l.b16 %v220
    %v909 = vunpack.c.h.b16 %v220
    %v910 = vunpack.c.l.b16 %v221
    %v911 = vunpack.c.h.b16 %v221
    %v912 = vunpack.c.l.b16 %v222
    %v913 = vunpack.c.h.b16 %v222
    %v914 = vunpack.c.l.b16 %v223
    %v915 = vunpack.c.h.b16 %v223
    %v916 = vunpack.c.l.b16 %v224
    %v917 = vunpack.c.h.b16 %v224
    %v918 = vunpack.c.l.b16 %v225
    %v919 = vunpack.c.h.b16 %v225
    %v920 = vunpack.c.l.b16 %v226
    %v921 = vunpack.c.h.b16 %v226
    %v922 = vunpack.c.l.b16 %v227
    %v923 = vunpack.c.h.b16 %v227
    %v924 = vunpack.c.l.b16 %v228
    %v925 = vunpack.c.h.b16 %v228
    %v926 = vunpack.c.l.b16 %v229
    %v927 = vunpack.c.h.b16 %v229
    %v928 = vunpack.c.l.b16 %v230
    %v929 = vunpack.c.h.b16 %v230
    %v930 = vunpack.c.l.b16 %v231
    %v931 = vunpack.c.h.b16 %v231
    %v932 = vunpack.c.l.b16 %v232
    %v933 = vunpack.c.h.b16 %v232
    %v934 = vunpack.c.l.b16 %v233
    %v935 = vunpack.c.h.b16 %v233
    %v936 = vunpack.c.l.b16 %v234
    %v937 = vunpack.c.h.b16 %v234
    %v938 = vunpack.c.l.b16 %v235
    %v939 = vunpack.c.h.b16 %v235
    %v940 = vunpack.c.l.b16 %v236
    %v941 = vunpack.c.h.b16 %v236
    %v942 = vunpack.c.l.b16 %v237
    %v943 = vunpack.c.h.b16 %v237
    %v944 = vunpack.c.l.b16 %v238
    %v945 = vunpack.c.h.b16 %v238
    %v946 = vunpack.c.l.b16 %v239
    %v947 = vunpack.c.h.b16 %v239
    %v948 = vunpack.c.l.b16 %v240
    %v949 = vunpack.c.h.b16 %v240
    %v950 = vunpack.c.l.b16 %v241
    %v951 = vunpack.c.h.b16 %v241
    %v952 = vunpack.c.l.b16 %v242
    %v953 = vunpack.c.h.b16 %v242
    %v954 = vunpack.c.l.b16 %v243
    %v955 = vunpack.c.h.b16 %v243
    %v956 = vunpack.c.l.b16 %v244
    %v957 = vunpack.c.h.b16 %v244
    %v958 = vunpack.c.l.b16 %v245
    %v959 = vunpack.c.h.b16 %v245
    %v960 = vunpack.c.l.b16 %v246
    %v961 = vunpack.c.h.b16 %v246
    %v962 = vunpack.c.l.b16 %v247
    %v963 = vunpack.c.h.b16 %v247
    %v964 = vunpack.c.l.b16 %v248
    %v965 = vunpack.c.h.b16 %v248
    %v966 = vunpack.c.l.b16 %v249
    %v967 = vunpack.c.h.b16 %v249
    %v968 = vunpack.c.l.b16 %v250
    %v969 = vunpack.c.h.b16 %v250
    %v970 = vunpack.c.l.b16 %v251
    %v971 = vunpack.c.h.b16 %v251
    %v972 = vunpack.c.l.b16 %v252
    %v973 = vunpack.c.h.b16 %v252
    %v974 = vunpack.c.l.b16 %v253
    %v975 = vunpack.c.h.b16 %v253
    %v976 = vunpack.c.l.b16 %v254
    %v977 = vunpack.c.h.b16 %v254
    %v978 = vunpack.c.l.b16 %v255
    %v979 = vunpack.c.h.b16 %v255
    %v980 = vunpack.c.l.b16 %v256
    %v981 = vunpack.c.h.b16 %v256
    %v982 = vunpack.c.l.b16 %v257
    %v983 = vunpack.c.h.b16 %v257
    %v984 = vunpack.c.l.b16 %v258
    %v985 = vunpack.c.h.b16 %v258
    %v986 = vunpack.c.l.b16 %v259
    %v987 = vunpack.c.h.b16 %v259
    %v988 = vunpack.c.l.b16 %v260
    %v989 = vunpack.c.h.b16 %v260
    %v990 = vunpack.c.l.b16 %v261
    %v991 = vunpack.c.h.b16 %v261
    %v992 = vunpack.c.l.b16 %v262
    %v993 = vunpack.c.h.b16 %v262
    %v994 = vunpack.c.l.b16 %v263
    %v995 = vunpack.c.h.b16 %v263
    %v996 = vunpack.c.l.b16 %v264
    %v997 = vunpack.c.h.b16 %v264
    %v998 = vunpack.c.l.b16 %v265
    %v999 = vunpack.c.h.b16 %v265
    %v1000 = vunpack.c.l.b16 %v266
    %v1001 = vunpack.c.h.b16 %v266
    %v1002 = vunpack.c.l.b16 %v267
    %v1003 = vunpack.c.h.b16 %v267
    %v1004 = vunpack.c.l.b16 %v268
    %v1005 = vunpack.c.h.b16 %v268
    %v1006 = vunpack.c.l.b16 %v269
    %v1007 = vunpack.c.h.b16 %v269
    %v1008 = vunpack.c.l.b16 %v270
    %v1009 = vunpack.c.h.b16 %v270
    %v1010 = vunpack.c.l.b16 %v271
    %v1011 = vunpack.c.h.b16 %v271
    %v1012 = vunpack.c.l.b16 %v272
    %v1013 = vunpack.c.h.b16 %v272
    %v1014 = vunpack.c.l.b16 %v273
    %v1015 = vunpack.c.h.b16 %v273
    %v1016 = vunpack.c.l.b16 %v274
    %v1017 = vunpack.c.h.b16 %v274
    %v1018 = vunpack.c.l.b16 %v275
    %v1019 = vunpack.c.h.b16 %v275
    %v1020 = vunpack.c.l.b16 %v276
    %v1021 = vunpack.c.h.b16 %v276
    %v1022 = vunpack.c.l.b16 %v277
    %v1023 = vunpack.c.h.b16 %v277
    %v1024 = vunpack.c.l.b16 %v278
    %v1025 = vunpack.c.h.b16 %v278
    %v1026 = vunpack.c.l.b16 %v279
    %v1027 = vunpack.c.h.b16 %v279
    %v1028 = vunpack.c.l.b16 %v280
    %v1029 = vunpack.c.h.b16 %v280
    %v1030 = vunpack.c.l.b16 %v281
    %v1031 = vunpack.c.h.b16 %v281
    %v1032 = vunpack.c.l.b16 %v282
    %v1033 = vunpack.c.h.b16 %v282
    %v1034 = vunpack.c.l.b16 %v283
    %v1035 = vunpack.c.h.b16 %v283
    %v1036 = vunpack.c.l.b16 %v284
    %v1037 = vunpack.c.h.b16 %v284
    %v1038 = vunpack.c.l.b16 %v285
    %v1039 = vunpack.c.h.b16 %v285
    %v1040 = vunpack.c.l.b16 %v286
    %v1041 = vunpack.c.h.b16 %v286
    %v1042 = vunpack.c.l.b16 %v287
    %v1043 = vunpack.c.h.b16 %v287
    %v1044 = vunpack.c.l.b16 %v288
    %v1045 = vunpack.c.h.b16 %v288
    %v1046 = vunpack.c.l.b16 %v289
    %v1047 = vunpack.c.h.b16 %v289
    %v1048 = vunpack.c.l.b16 %v290
    %v1049 = vunpack.c.h.b16 %v290
    %v1050 = vunpack.c.l.b16 %v291
    %v1051 = vunpack.c.h.b16 %v291
    %v1052 = vunpack.c.l.b16 %v292
    %v1053 = vunpack.c.h.b16 %v292
    %v1054 = vunpack.c.l.b16 %v293
    %v1055 = vunpack.c.h.b16 %v293
    %v1056 = vunpack.c.l.b16 %v294
    %v1057 = vunpack.c.h.b16 %v294
    %v1058 = vunpack.c.l.b16 %v295
    %v1059 = vunpack.c.h.b16 %v295
    %v1060 = vunpack.c.l.b16 %v296
    %v1061 = vunpack.c.h.b16 %v296
    %v1062 = vunpack.c.l.b16 %v297
    %v1063 = vunpack.c.h.b16 %v297
    %v1064 = vunpack.c.l.b16 %v298
    %v1065 = vunpack.c.h.b16 %v298
    %v1066 = vunpack.c.l.b16 %v299
    %v1067 = vunpack.c.h.b16 %v299
    %v1068 = vunpack.c.l.b16 %v300
    %v1069 = vunpack.c.h.b16 %v300
    %v1070 = vunpack.c.l.b16 %v301
    %v1071 = vunpack.c.h.b16 %v301
    %v1072 = vunpack.c.l.b16 %v302
    %v1073 = vunpack.c.h.b16 %v302
    %v1074 = vunpack.c.l.b16 %v303
    %v1075 = vunpack.c.h.b16 %v303
    %v1076 = vunpack.c.l.b16 %v304
    %v1077 = vunpack.c.h.b16 %v304
    %v1078 = vunpack.c.l.b16 %v305
    %v1079 = vunpack.c.h.b16 %v305
    %v1080 = vunpack.c.l.b16 %v306
    %v1081 = vunpack.c.h.b16 %v306
    %v1082 = vunpack.c.l.b16 %v307
    %v1083 = vunpack.c.h.b16 %v307
    %v1084 = vunpack.c.l.b16 %v308
    %v1085 = vunpack.c.h.b16 %v308
    %v1086 = vunpack.c.l.b16 %v309
    %v1087 = vunpack.c.h.b16 %v309
    %v1088 = vunpack.c.l.b16 %v310
    %v1089 = vunpack.c.h.b16 %v310
    %v1090 = vunpack.c.l.b16 %v311
    %v1091 = vunpack.c.h.b16 %v311
    %v1092 = vunpack.c.l.b16 %v312
    %v1093 = vunpack.c.h.b16 %v312
    %v1094 = vunpack.c.l.b16 %v313
    %v1095 = vunpack.c.h.b16 %v313
    %v1096 = vunpack.c.l.b16 %v314
    %v1097 = vunpack.c.h.b16 %v314
    %v1098 = vunpack.c.l.b16 %v315
    %v1099 = vunpack.c.h.b16 %v315
    %v1100 = vunpack.c.l.b16 %v316
    %v1101 = vunpack.c.h.b16 %v316
    %v1102 = vunpack.c.l.b16 %v317
    %v1103 = vunpack.c.h.b16 %v317
    %v1104 = vunpack.c.l.b16 %v318
    %v1105 = vunpack.c.h.b16 %v318
    %v1106 = vunpack.c.l.b16 %v319
    %v1107 = vunpack.c.h.b16 %v319
    %v1108 = vunpack.c.l.b16 %v320
    %v1109 = vunpack.c.h.b16 %v320
    %v1110 = vunpack.c.l.b16 %v321
    %v1111 = vunpack.c.h.b16 %v321
    %v1112 = vunpack.c.l.b16 %v322
    %v1113 = vunpack.c.h.b16 %v322
    %v1114 = vunpack.c.l.b16 %v323
    %v1115 = vunpack.c.h.b16 %v323
    %v1116 = vunpack.c.l.b16 %v324
    %v1117 = vunpack.c.h.b16 %v324
    %v1118 = vunpack.c.l.b16 %v325
    %v1119 = vunpack.c.h.b16 %v325
    %v1120 = vunpack.c.l.b16 %v326
    %v1121 = vunpack.c.h.b16 %v326
    %v1122 = vunpack.c.l.b16 %v327
    %v1123 = vunpack.c.h.b16 %v327
    %v1124 = vpack.c.b16 %v616, %v612
    %v1125 = vpack.c.b16 %v617, %v613
    %v1126 = vpack.c.b16 %v618, %v614
    %v1127 = vpack.c.b16 %v619, %v615
    %v1128 = vpack.c.b16 %v624, %v620
    %v1129 = vpack.c.b16 %v625, %v621
    %v1130 = vpack.c.b16 %v626, %v622
    %v1131 = vpack.c.b16 %v627, %v623
    %v1132 = vpack.c.b16 %v632, %v628
    %v1133 = vpack.c.b16 %v633, %v629
    %v1134 = vpack.c.b16 %v634, %v630
    %v1135 = vpack.c.b16 %v635, %v631
    %v1136 = vpack.c.b16 %v640, %v636
    %v1137 = vpack.c.b16 %v641, %v637
    %v1138 = vpack.c.b16 %v642, %v638
    %v1139 = vpack.c.b16 %v643, %v639
    %v1140 = vpack.c.b16 %v648, %v644
    %v1141 = vpack.c.b16 %v649, %v645
    %v1142 = vpack.c.b16 %v650, %v646
    %v1143 = vpack.c.b16 %v651, %v647
    %v1144 = vpack.c.b16 %v656, %v652
    %v1145 = vpack.c.b16 %v657, %v653
    %v1146 = vpack.c.b16 %v658, %v654
    %v1147 = vpack.c.b16 %v659, %v655
    %v1148 = vpack.c.b16 %v664, %v660
    %v1149 = vpack.c.b16 %v665, %v661
    %v1150 = vpack.c.b16 %v666, %v662
    %v1151 = vpack.c.b16 %v667, %v663
    %v1152 = vpack.c.b16 %v672, %v668
    %v1153 = vpack.c.b16 %v673, %v669
    %v1154 = vpack.c.b16 %v674, %v670
    %v1155 = vpack.c.b16 %v675, %v671
    %v1156 = vpack.c.b16 %v680, %v676
    %v1157 = vpack.c.b16 %v681, %v677
    %v1158 = vpack.c.b16 %v682, %v678
    %v1159 = vpack.c.b16 %v683, %v679
    %v1160 = vpack.c.b16 %v688, %v684
    %v1161 = vpack.c.b16 %v689, %v685
    %v1162 = vpack.c.b16 %v690, %v686
    %v1163 = vpack.c.b16 %v691, %v687
    %v1164 = vpack.c.b16 %v696, %v692
    %v1165 = vpack.c.b16 %v697, %v693
    %v1166 = vpack.c.b16 %v698, %v694
    %v1167 = vpack.c.b16 %v699, %v695
    %v1168 = vpack.c.b16 %v704, %v700
    %v1169 = vpack.c.b16 %v705, %v701
    %v1170 = vpack.c.b16 %v706, %v702
    %v1171 = vpack.c.b16 %v707, %v703
    %v1172 = vpack.c.b16 %v712, %v708
    %v1173 = vpack.c.b16 %v713, %v709
    %v1174 = vpack.c.b16 %v714, %v710
    %v1175 = vpack.c.b16 %v715, %v711
    %v1176 = vpack.c.b16 %v720, %v716
    %v1177 = vpack.c.b16 %v721, %v717
    %v1178 = vpack.c.b16 %v722, %v718
    %v1179 = vpack.c.b16 %v723, %v719
    %v1180 = vpack.c.b16 %v728, %v724
    %v1181 = vpack.c.b16 %v729, %v725
    %v1182 = vpack.c.b16 %v730, %v726
    %v1183 = vpack.c.b16 %v731, %v727
    %v1184 = vpack.c.b16 %v736, %v732
    %v1185 = vpack.c.b16 %v737, %v733
    %v1186 = vpack.c.b16 %v738, %v734
    %v1187 = vpack.c.b16 %v739, %v735
    %v1188 = vpack.c.b16 %v744, %v740
    %v1189 = vpack.c.b16 %v745, %v741
    %v1190 = vpack.c.b16 %v746, %v742
    %v1191 = vpack.c.b16 %v747, %v743
    %v1192 = vpack.c.b16 %v752, %v748
    %v1193 = vpack.c.b16 %v753, %v749
    %v1194 = vpack.c.b16 %v754, %v750
    %v1195 = vpack.c.b16 %v755, %v751
    %v1196 = vpack.c.b16 %v760, %v756
    %v1197 = vpack.c.b16 %v761, %v757
    %v1198 = vpack.c.b16 %v762, %v758
    %v1199 = vpack.c.b16 %v763, %v759
    %v1200 = vpack.c.b16 %v768, %v764
    %v1201 = vpack.c.b16 %v769, %v765
    %v1202 = vpack.c.b16 %v770, %v766
    %v1203 = vpack.c.b16 %v771, %v767
    %v1204 = vpack.c.b16 %v776, %v772
    %v1205 = vpack.c.b16 %v777, %v773
    %v1206 = vpack.c.b16 %v778, %v774
    %v1207 = vpack.c.b16 %v779, %v775
    %v1208 = vpack.c.b16 %v784, %v780
    %v1209 = vpack.c.b16 %v785, %v781
    %v1210 = vpack.c.b16 %v786, %v782
    %v1211 = vpack.c.b16 %v787, %v783
    %v1212 = vpack.c.b16 %v792, %v788
    %v1213 = vpack.c.b16 %v793, %v789
    %v1214 = vpack.c.b16 %v794, %v790
    %v1215 = vpack.c.b16 %v795, %v791
    %v1216 = vpack.c.b16 %v800, %v796
    %v1217 = vpack.c.b16 %v801, %v797
    %v1218 = vpack.c.b16 %v802, %v798
    %v1219 = vpack.c.b16 %v803, %v799
    %v1220 = vpack.c.b16 %v808, %v804
    %v1221 = vpack.c.b16 %v809, %v805
    %v1222 = vpack.c.b16 %v810, %v806
    %v1223 = vpack.c.b16 %v811, %v807
    %v1224 = vpack.c.b16 %v816, %v812
    %v1225 = vpack.c.b16 %v817, %v813
    %v1226 = vpack.c.b16 %v818, %v814
    %v1227 = vpack.c.b16 %v819, %v815
    %v1228 = vpack.c.b16 %v824, %v820
    %v1229 = vpack.c.b16 %v825, %v821
    %v1230 = vpack.c.b16 %v826, %v822
    %v1231 = vpack.c.b16 %v827, %v823
    %v1232 = vpack.c.b16 %v832, %v828
    %v1233 = vpack.c.b16 %v833, %v829
    %v1234 = vpack.c.b16 %v834, %v830
    %v1235 = vpack.c.b16 %v835, %v831
    %v1236 = vpack.c.b16 %v840, %v836
    %v1237 = vpack.c.b16 %v841, %v837
    %v1238 = vpack.c.b16 %v842, %v838
    %v1239 = vpack.c.b16 %v843, %v839
    %v1240 = vpack.c.b16 %v848, %v844
    %v1241 = vpack.c.b16 %v849, %v845
    %v1242 = vpack.c.b16 %v850, %v846
    %v1243 = vpack.c.b16 %v851, %v847
    %v1244 = vpack.c.b16 %v856, %v852
    %v1245 = vpack.c.b16 %v857, %v853
    %v1246 = vpack.c.b16 %v858, %v854
    %v1247 = vpack.c.b16 %v859, %v855
    %v1248 = vpack.c.b16 %v864, %v860
    %v1249 = vpack.c.b16 %v865, %v861
    %v1250 = vpack.c.b16 %v866, %v862
    %v1251 = vpack.c.b16 %v867, %v863
    %v1252 = vpack.c.b16 %v872, %v868
    %v1253 = vpack.c.b16 %v873, %v869
    %v1254 = vpack.c.b16 %v874, %v870
    %v1255 = vpack.c.b16 %v875, %v871
    %v1256 = vpack.c.b16 %v880, %v876
    %v1257 = vpack.c.b16 %v881, %v877
    %v1258 = vpack.c.b16 %v882, %v878
    %v1259 = vpack.c.b16 %v883, %v879
    %v1260 = vpack.c.b16 %v888, %v884
    %v1261 = vpack.c.b16 %v889, %v885
    %v1262 = vpack.c.b16 %v890, %v886
    %v1263 = vpack.c.b16 %v891, %v887
    %v1264 = vpack.c.b16 %v896, %v892
    %v1265 = vpack.c.b16 %v897, %v893
    %v1266 = vpack.c.b16 %v898, %v894
    %v1267 = vpack.c.b16 %v899, %v895
    %v1268 = vpack.c.b16 %v904, %v900
    %v1269 = vpack.c.b16 %v905, %v901
    %v1270 = vpack.c.b16 %v906, %v902
    %v1271 = vpack.c.b16 %v907, %v903
    %v1272 = vpack.c.b16 %v912, %v908
    %v1273 = vpack.c.b16 %v913, %v909
    %v1274 = vpack.c.b16 %v914, %v910
    %v1275 = vpack.c.b16 %v915, %v911
    %v1276 = vpack.c.b16 %v920, %v916
    %v1277 = vpack.c.b16 %v921, %v917
    %v1278 = vpack.c.b16 %v922, %v918
    %v1279 = vpack.c.b16 %v923, %v919
    %v1280 = vpack.c.b16 %v928, %v924
    %v1281 = vpack.c.b16 %v929, %v925
    %v1282 = vpack.c.b16 %v930, %v926
    %v1283 = vpack.c.b16 %v931, %v927
    %v1284 = vpack.c.b16 %v936, %v932
    %v1285 = vpack.c.b16 %v937, %v933
    %v1286 = vpack.c.b16 %v938, %v934
    %v1287 = vpack.c.b16 %v939, %v935
    %v1288 = vpack.c.b16 %v944, %v940
    %v1289 = vpack.c.b16 %v945, %v941
    %v1290 = vpack.c.b16 %v946, %v942
    %v1291 = vpack.c.b16 %v947, %v943
    %v1292 = vpack.c.b16 %v952, %v948
    %v1293 = vpack.c.b16 %v953, %v949
    %v1294 = vpack.c.b16 %v954, %v950
    %v1295 = vpack.c.b16 %v955, %v951
    %v1296 = vpack.c.b16 %v960, %v956
    %v1297 = vpack.c.b16 %v961, %v957
    %v1298 = vpack.c.b16 %v962, %v958
    %v1299 = vpack.c.b16 %v963, %v959
    %v1300 = vpack.c.b16 %v968, %v964
    %v1301 = vpack.c.b16 %v969, %v965
    %v1302 = vpack.c.b16 %v970, %v966
    %v1303 = vpack.c.b16 %v971, %v967
    %v1304 = vpack.c.b16 %v976, %v972
    %v1305 = vpack.c.b16 %v977, %v973
    %v1306 = vpack.c.b16 %v978, %v974
    %v1307 = vpack.c.b16 %v979, %v975
    %v1308 = vpack.c.b16 %v984, %v980
    %v1309 = vpack.c.b16 %v985, %v981
    %v1310 = vpack.c.b16 %v986, %v982
    %v1311 = vpack.c.b16 %v987, %v983
    %v1312 = vpack.c.b16 %v992, %v988
    %v1313 = vpack.c.b16 %v993, %v989
    %v1314 = vpack.c.b16 %v994, %v990
    %v1315 = vpack.c.b16 %v995, %v991
    %v1316 = vpack.c.b16 %v1000, %v996
    %v1317 = vpack.c.b16 %v1001, %v997
    %v1318 = vpack.c.b16 %v1002, %v998
    %v1319 = vpack.c.b16 %v1003, %v999
    %v1320 = vpack.c.b16 %v1008, %v1004
    %v1321 = vpack.c.b16 %v1009, %v1005
    %v1322 = vpack.c.b16 %v1010, %v1006
    %v1323 = vpack.c.b16 %v1011, %v1007
    %v1324 = vpack.c.b16 %v1016, %v1012
    %v1325 = vpack.c.b16 %v1017, %v1013
    %v1326 = vpack.c.b16 %v1018, %v1014
    %v1327 = vpack.c.b16 %v1019, %v1015
    %v1328 = vpack.c.b16 %v1024, %v1020
    %v1329 = vpack.c.b16 %v1025, %v1021
    %v1330 = vpack.c.b16 %v1026, %v1022
    %v1331 = vpack.c.b16 %v1027, %v1023
    %v1332 = vpack.c.b16 %v1032, %v1028
    %v1333 = vpack.c.b16 %v1033, %v1029
    %v1334 = vpack.c.b16 %v1034, %v1030
    %v1335 = vpack.c.b16 %v1035, %v1031
    %v1336 = vpack.c.b16 %v1040, %v1036
    %v1337 = vpack.c.b16 %v1041, %v1037
    %v1338 = vpack.c.b16 %v1042, %v1038
    %v1339 = vpack.c.b16 %v1043, %v1039
    %v1340 = vpack.c.b16 %v1048, %v1044
    %v1341 = vpack.c.b16 %v1049, %v1045
    %v1342 = vpack.c.b16 %v1050, %v1046
    %v1343 = vpack.c.b16 %v1051, %v1047
    %v1344 = vpack.c.b16 %v1056, %v1052
    %v1345 = vpack.c.b16 %v1057, %v1053
    %v1346 = vpack.c.b16 %v1058, %v1054
    %v1347 = vpack.c.b16 %v1059, %v1055
    %v1348 = vpack.c.b16 %v1064, %v1060
    %v1349 = vpack.c.b16 %v1065, %v1061
    %v1350 = vpack.c.b16 %v1066, %v1062
    %v1351 = vpack.c.b16 %v1067, %v1063
    %v1352 = vpack.c.b16 %v1072, %v1068
    %v1353 = vpack.c.b16 %v1073, %v1069
    %v1354 = vpack.c.b16 %v1074, %v1070
    %v1355 = vpack.c.b16 %v1075, %v1071
    %v1356 = vpack.c.b16 %v1080, %v1076
    %v1357 = vpack.c.b16 %v1081, %v1077
    %v1358 = vpack.c.b16 %v1082, %v1078
    %v1359 = vpack.c.b16 %v1083, %v1079
    %v1360 = vpack.c.b16 %v1088, %v1084
    %v1361 = vpack.c.b16 %v1089, %v1085
    %v1362 = vpack.c.b16 %v1090, %v1086
    %v1363 = vpack.c.b16 %v1091, %v1087
    %v1364 = vpack.c.b16 %v1096, %v1092
    %v1365 = vpack.c.b16 %v1097, %v1093
    %v1366 = vpack.c.b16 %v1098, %v1094
    %v1367 = vpack.c.b16 %v1099, %v1095
    %v1368 = vpack.c.b16 %v1104, %v1100
    %v1369 = vpack.c.b16 %v1105, %v1101
    %v1370 = vpack.c.b16 %v1106, %v1102
    %v1371 = vpack.c.b16 %v1107, %v1103
    %v1372 = vpack.c.b16 %v1112, %v1108
    %v1373 = vpack.c.b16 %v1113, %v1109
    %v1374 = vpack.c.b16 %v1114, %v1110
    %v1375 = vpack.c.b16 %v1115, %v1111
    %v1376 = vpack.c.b16 %v1120, %v1116
    %v1377 = vpack.c.b16 %v1121, %v1117
    %v1378 = vpack.c.b16 %v1122, %v1118
    %v1379 = vpack.c.b16 %v1123, %v1119
    %1636 = vmatprep.subr.bf16.mxu0 %v1125
    %1637 = vmatpush1.bf16.msra.mxu0 %v1124
    %1638 = vmatprep.subr.bf16.mxu0 %v1129
    %1639 = vmatpush1.bf16.msra.mxu0 %v1128
    %1640 = vmatprep.subr.bf16.mxu0 %v1133
    %1641 = vmatpush1.bf16.msra.mxu0 %v1132
    %1642 = vmatprep.subr.bf16.mxu0 %v1137
    %1643 = vmatpush1.bf16.msra.mxu0 %v1136
    %1644 = vmatprep.subr.bf16.mxu0 %v1141
    %1645 = vmatpush1.bf16.msra.mxu0 %v1140
    %1646 = vmatprep.subr.bf16.mxu0 %v1145
    %1647 = vmatpush1.bf16.msra.mxu0 %v1144
    %1648 = vmatprep.subr.bf16.mxu0 %v1149
    %1649 = vmatpush1.bf16.msra.mxu0 %v1148
    %1650 = vmatprep.subr.bf16.mxu0 %v1153
    %1651 = vmatpush1.bf16.msra.mxu0 %v1152
    %1652 = vmatprep.subr.bf16.mxu0 %v1157
    %1653 = vmatpush1.bf16.msra.mxu0 %v1156
    %1654 = vmatprep.subr.bf16.mxu0 %v1161
    %1655 = vmatpush1.bf16.msra.mxu0 %v1160
    %1656 = vmatprep.subr.bf16.mxu0 %v1165
    %1657 = vmatpush1.bf16.msra.mxu0 %v1164
    %1658 = vmatprep.subr.bf16.mxu0 %v1169
    %1659 = vmatpush1.bf16.msra.mxu0 %v1168
    %1660 = vmatprep.subr.bf16.mxu0 %v1173
    %1661 = vmatpush1.bf16.msra.mxu0 %v1172
    %1662 = vmatprep.subr.bf16.mxu0 %v1177
    %1663 = vmatpush1.bf16.msra.mxu0 %v1176
    %1664 = vmatprep.subr.bf16.mxu0 %v1181
    %1665 = vmatpush1.bf16.msra.mxu0 %v1180
    %1666 = vmatprep.subr.bf16.mxu0 %v1185
    %1667 = vmatpush1.bf16.msra.mxu0 %v1184
    %1668 = vmatprep.mubr.bf16.mxu0 %v341
    %1669 = vmatmul.mubr.bf16.gmra.mrb[0].mxu0 %v340
    %v1670 = vpop.f32.mrb[0].mxu0
    %v1671 = vadd.f32 0.0, %v1670
    %v1672 = vpop.f32.mrb[0].mxu0
    %v1673 = vadd.f32 0.0, %v1672
    %v1674 = vpop.f32.mrb[0].mxu0
    %v1675 = vpop.f32.mrb[0].mxu0
    %1676 = vdwg.mxu0
    %1677 = vmatprep.subr.bf16.mxu0 %v1189
    %1678 = vmatpush1.bf16.msra.mxu0 %v1188
    %1679 = vmatprep.subr.bf16.mxu0 %v1193
    %1680 = vmatpush1.bf16.msra.mxu0 %v1192
    %1681 = vmatprep.subr.bf16.mxu0 %v1197
    %1682 = vmatpush1.bf16.msra.mxu0 %v1196
    %1683 = vmatprep.subr.bf16.mxu0 %v1201
    %1684 = vmatpush1.bf16.msra.mxu0 %v1200
    %1685 = vmatprep.subr.bf16.mxu0 %v1205
    %1686 = vmatpush1.bf16.msra.mxu0 %v1204
    %1687 = vmatprep.subr.bf16.mxu0 %v1209
    %1688 = vmatpush1.bf16.msra.mxu0 %v1208
    %1689 = vmatprep.subr.bf16.mxu0 %v1213
    %1690 = vmatpush1.bf16.msra.mxu0 %v1212
    %1691 = vmatprep.subr.bf16.mxu0 %v1217
    %1692 = vmatpush1.bf16.msra.mxu0 %v1216
    %1693 = vmatprep.subr.bf16.mxu0 %v1221
    %1694 = vmatpush1.bf16.msra.mxu0 %v1220
    %1695 = vmatprep.subr.bf16.mxu0 %v1225
    %1696 = vmatpush1.bf16.msra.mxu0 %v1224
    %1697 = vmatprep.subr.bf16.mxu0 %v1229
    %1698 = vmatpush1.bf16.msra.mxu0 %v1228
    %1699 = vmatprep.subr.bf16.mxu0 %v1233
    %1700 = vmatpush1.bf16.msra.mxu0 %v1232
    %1701 = vmatprep.subr.bf16.mxu0 %v1237
    %1702 = vmatpush1.bf16.msra.mxu0 %v1236
    %1703 = vmatprep.subr.bf16.mxu0 %v1241
    %1704 = vmatpush1.bf16.msra.mxu0 %v1240
    %1705 = vmatprep.subr.bf16.mxu0 %v1245
    %1706 = vmatpush1.bf16.msra.mxu0 %v1244
    %1707 = vmatprep.subr.bf16.mxu0 %v1249
    %1708 = vmatpush1.bf16.msra.mxu0 %v1248
    %1709 = vmatprep.mubr.bf16.mxu0 %v343
    %1710 = vmatmul.mubr.bf16.gmra.mrb[0].mxu0 %v342
    %v1711 = vpop.f32.mrb[0].mxu0
    %v1712 = vadd.f32 %v1671, %v1711
    %v1713 = vpop.f32.mrb[0].mxu0
    %v1714 = vadd.f32 %v1673, %v1713
    %v1715 = vpop.f32.mrb[0].mxu0
    %v1716 = vpop.f32.mrb[0].mxu0
    %1717 = vdwg.mxu0
    %1718 = vmatprep.subr.bf16.mxu0 %v1253
    %1719 = vmatpush1.bf16.msra.mxu0 %v1252
    %1720 = vmatprep.subr.bf16.mxu0 %v1257
    %1721 = vmatpush1.bf16.msra.mxu0 %v1256
    %1722 = vmatprep.subr.bf16.mxu0 %v1261
    %1723 = vmatpush1.bf16.msra.mxu0 %v1260
    %1724 = vmatprep.subr.bf16.mxu0 %v1265
    %1725 = vmatpush1.bf16.msra.mxu0 %v1264
    %1726 = vmatprep.subr.bf16.mxu0 %v1269
    %1727 = vmatpush1.bf16.msra.mxu0 %v1268
    %1728 = vmatprep.subr.bf16.mxu0 %v1273
    %1729 = vmatpush1.bf16.msra.mxu0 %v1272
    %1730 = vmatprep.subr.bf16.mxu0 %v1277
    %1731 = vmatpush1.bf16.msra.mxu0 %v1276
    %1732 = vmatprep.subr.bf16.mxu0 %v1281
    %1733 = vmatpush1.bf16.msra.mxu0 %v1280
    %1734 = vmatprep.subr.bf16.mxu0 %v1285
    %1735 = vmatpush1.bf16.msra.mxu0 %v1284
    %1736 = vmatprep.subr.bf16.mxu0 %v1289
    %1737 = vmatpush1.bf16.msra.mxu0 %v1288
    %1738 = vmatprep.subr.bf16.mxu0 %v1293
    %1739 = vmatpush1.bf16.msra.mxu0 %v1292
    %1740 = vmatprep.subr.bf16.mxu0 %v1297
    %1741 = vmatpush1.bf16.msra.mxu0 %v1296
    %1742 = vmatprep.subr.bf16.mxu0 %v1301
    %1743 = vmatpush1.bf16.msra.mxu0 %v1300
    %1744 = vmatprep.subr.bf16.mxu0 %v1305
    %1745 = vmatpush1.bf16.msra.mxu0 %v1304
    %1746 = vmatprep.subr.bf16.mxu0 %v1309
    %1747 = vmatpush1.bf16.msra.mxu0 %v1308
    %1748 = vmatprep.subr.bf16.mxu0 %v1313
    %1749 = vmatpush1.bf16.msra.mxu0 %v1312
    %1750 = vmatprep.mubr.bf16.mxu0 %v345
    %1751 = vmatmul.mubr.bf16.gmra.mrb[0].mxu0 %v344
    %v1752 = vpop.f32.mrb[0].mxu0
    %v1753 = vadd.f32 %v1712, %v1752
    %v1754 = vpop.f32.mrb[0].mxu0
    %v1755 = vadd.f32 %v1714, %v1754
    %v1756 = vpop.f32.mrb[0].mxu0
    %v1757 = vpop.f32.mrb[0].mxu0
    %1758 = vdwg.mxu0
    %1759 = vmatprep.subr.bf16.mxu0 %v1317
    %1760 = vmatpush1.bf16.msra.mxu0 %v1316
    %1761 = vmatprep.subr.bf16.mxu0 %v1321
    %1762 = vmatpush1.bf16.msra.mxu0 %v1320
    %1763 = vmatprep.subr.bf16.mxu0 %v1325
    %1764 = vmatpush1.bf16.msra.mxu0 %v1324
    %1765 = vmatprep.subr.bf16.mxu0 %v1329
    %1766 = vmatpush1.bf16.msra.mxu0 %v1328
    %1767 = vmatprep.subr.bf16.mxu0 %v1333
    %1768 = vmatpush1.bf16.msra.mxu0 %v1332
    %1769 = vmatprep.subr.bf16.mxu0 %v1337
    %1770 = vmatpush1.bf16.msra.mxu0 %v1336
    %1771 = vmatprep.subr.bf16.mxu0 %v1341
    %1772 = vmatpush1.bf16.msra.mxu0 %v1340
    %1773 = vmatprep.subr.bf16.mxu0 %v1345
    %1774 = vmatpush1.bf16.msra.mxu0 %v1344
    %1775 = vmatprep.subr.bf16.mxu0 %v1349
    %1776 = vmatpush1.bf16.msra.mxu0 %v1348
    %1777 = vmatprep.subr.bf16.mxu0 %v1353
    %1778 = vmatpush1.bf16.msra.mxu0 %v1352
    %1779 = vmatprep.subr.bf16.mxu0 %v1357
    %1780 = vmatpush1.bf16.msra.mxu0 %v1356
    %1781 = vmatprep.subr.bf16.mxu0 %v1361
    %1782 = vmatpush1.bf16.msra.mxu0 %v1360
    %1783 = vmatprep.subr.bf16.mxu0 %v1365
    %1784 = vmatpush1.bf16.msra.mxu0 %v1364
    %1785 = vmatprep.subr.bf16.mxu0 %v1369
    %1786 = vmatpush1.bf16.msra.mxu0 %v1368
    %1787 = vmatprep.subr.bf16.mxu0 %v1373
    %1788 = vmatpush1.bf16.msra.mxu0 %v1372
    %1789 = vmatprep.subr.bf16.mxu0 %v1377
    %1790 = vmatpush1.bf16.msra.mxu0 %v1376
    %1791 = vmatprep.mubr.bf16.mxu0 %v347
    %1792 = vmatmul.mubr.bf16.gmra.mrb[0].mxu0 %v346
    %v1793 = vpop.f32.mrb[0].mxu0
    %v1794 = vadd.f32 %v1753, %v1793
    %v1795 = vpop.f32.mrb[0].mxu0
    %v1796 = vadd.f32 %v1755, %v1795
    %v1797 = vpop.f32.mrb[0].mxu0
    %v1798 = vpop.f32.mrb[0].mxu0
    %1799 = vdwg.mxu0
    %1800 = vmatprep.subr.bf16.mxu0 %v1127
    %1801 = vmatpush1.bf16.msra.mxu0 %v1126
    %1802 = vmatprep.subr.bf16.mxu0 %v1131
    %1803 = vmatpush1.bf16.msra.mxu0 %v1130
    %1804 = vmatprep.subr.bf16.mxu0 %v1135
    %1805 = vmatpush1.bf16.msra.mxu0 %v1134
    %1806 = vmatprep.subr.bf16.mxu0 %v1139
    %1807 = vmatpush1.bf16.msra.mxu0 %v1138
    %1808 = vmatprep.subr.bf16.mxu0 %v1143
    %1809 = vmatpush1.bf16.msra.mxu0 %v1142
    %1810 = vmatprep.subr.bf16.mxu0 %v1147
    %1811 = vmatpush1.bf16.msra.mxu0 %v1146
    %1812 = vmatprep.subr.bf16.mxu0 %v1151
    %1813 = vmatpush1.bf16.msra.mxu0 %v1150
    %1814 = vmatprep.subr.bf16.mxu0 %v1155
    %1815 = vmatpush1.bf16.msra.mxu0 %v1154
    %1816 = vmatprep.subr.bf16.mxu0 %v1159
    %1817 = vmatpush1.bf16.msra.mxu0 %v1158
    %1818 = vmatprep.subr.bf16.mxu0 %v1163
    %1819 = vmatpush1.bf16.msra.mxu0 %v1162
    %1820 = vmatprep.subr.bf16.mxu0 %v1167
    %1821 = vmatpush1.bf16.msra.mxu0 %v1166
    %1822 = vmatprep.subr.bf16.mxu0 %v1171
    %1823 = vmatpush1.bf16.msra.mxu0 %v1170
    %1824 = vmatprep.subr.bf16.mxu0 %v1175
    %1825 = vmatpush1.bf16.msra.mxu0 %v1174
    %1826 = vmatprep.subr.bf16.mxu0 %v1179
    %1827 = vmatpush1.bf16.msra.mxu0 %v1178
    %1828 = vmatprep.subr.bf16.mxu0 %v1183
    %1829 = vmatpush1.bf16.msra.mxu0 %v1182
    %1830 = vmatprep.subr.bf16.mxu0 %v1187
    %1831 = vmatpush1.bf16.msra.mxu0 %v1186
    %1832 = vmatprep.mubr.bf16.mxu0 %v341
    %1833 = vmatmul.mubr.bf16.gmra.mrb[0].mxu0 %v340
    %v1834 = vpop.f32.mrb[0].mxu0
    %v1835 = vadd.f32 0.0, %v1834
    %v1836 = vpop.f32.mrb[0].mxu0
    %v1837 = vadd.f32 0.0, %v1836
    %v1838 = vpop.f32.mrb[0].mxu0
    %v1839 = vpop.f32.mrb[0].mxu0
    %1840 = vdwg.mxu0
    %1841 = vmatprep.subr.bf16.mxu0 %v1191
    %1842 = vmatpush1.bf16.msra.mxu0 %v1190
    %1843 = vmatprep.subr.bf16.mxu0 %v1195
    %1844 = vmatpush1.bf16.msra.mxu0 %v1194
    %1845 = vmatprep.subr.bf16.mxu0 %v1199
    %1846 = vmatpush1.bf16.msra.mxu0 %v1198
    %1847 = vmatprep.subr.bf16.mxu0 %v1203
    %1848 = vmatpush1.bf16.msra.mxu0 %v1202
    %1849 = vmatprep.subr.bf16.mxu0 %v1207
    %1850 = vmatpush1.bf16.msra.mxu0 %v1206
    %1851 = vmatprep.subr.bf16.mxu0 %v1211
    %1852 = vmatpush1.bf16.msra.mxu0 %v1210
    %1853 = vmatprep.subr.bf16.mxu0 %v1215
    %1854 = vmatpush1.bf16.msra.mxu0 %v1214
    %1855 = vmatprep.subr.bf16.mxu0 %v1219
    %1856 = vmatpush1.bf16.msra.mxu0 %v1218
    %1857 = vmatprep.subr.bf16.mxu0 %v1223
    %1858 = vmatpush1.bf16.msra.mxu0 %v1222
    %1859 = vmatprep.subr.bf16.mxu0 %v1227
    %1860 = vmatpush1.bf16.msra.mxu0 %v1226
    %1861 = vmatprep.subr.bf16.mxu0 %v1231
    %1862 = vmatpush1.bf16.msra.mxu0 %v1230
    %1863 = vmatprep.subr.bf16.mxu0 %v1235
    %1864 = vmatpush1.bf16.msra.mxu0 %v1234
    %1865 = vmatprep.subr.bf16.mxu0 %v1239
    %1866 = vmatpush1.bf16.msra.mxu0 %v1238
    %1867 = vmatprep.subr.bf16.mxu0 %v1243
    %1868 = vmatpush1.bf16.msra.mxu0 %v1242
    %1869 = vmatprep.subr.bf16.mxu0 %v1247
    %1870 = vmatpush1.bf16.msra.mxu0 %v1246
    %1871 = vmatprep.subr.bf16.mxu0 %v1251
    %1872 = vmatpush1.bf16.msra.mxu0 %v1250
    %1873 = vmatprep.mubr.bf16.mxu0 %v343
    %1874 = vmatmul.mubr.bf16.gmra.mrb[0].mxu0 %v342
    %v1875 = vpop.f32.mrb[0].mxu0
    %v1876 = vadd.f32 %v1835, %v1875
    %v1877 = vpop.f32.mrb[0].mxu0
    %v1878 = vadd.f32 %v1837, %v1877
    %v1879 = vpop.f32.mrb[0].mxu0
    %v1880 = vpop.f32.mrb[0].mxu0
    %1881 = vdwg.mxu0
    %1882 = vmatprep.subr.bf16.mxu0 %v1255
    %1883 = vmatpush1.bf16.msra.mxu0 %v1254
    %1884 = vmatprep.subr.bf16.mxu0 %v1259
    %1885 = vmatpush1.bf16.msra.mxu0 %v1258
    %1886 = vmatprep.subr.bf16.mxu0 %v1263
    %1887 = vmatpush1.bf16.msra.mxu0 %v1262
    %1888 = vmatprep.subr.bf16.mxu0 %v1267
    %1889 = vmatpush1.bf16.msra.mxu0 %v1266
    %1890 = vmatprep.subr.bf16.mxu0 %v1271
    %1891 = vmatpush1.bf16.msra.mxu0 %v1270
    %1892 = vmatprep.subr.bf16.mxu0 %v1275
    %1893 = vmatpush1.bf16.msra.mxu0 %v1274
    %1894 = vmatprep.subr.bf16.mxu0 %v1279
    %1895 = vmatpush1.bf16.msra.mxu0 %v1278
    %1896 = vmatprep.subr.bf16.mxu0 %v1283
    %1897 = vmatpush1.bf16.msra.mxu0 %v1282
    %1898 = vmatprep.subr.bf16.mxu0 %v1287
    %1899 = vmatpush1.bf16.msra.mxu0 %v1286
    %1900 = vmatprep.subr.bf16.mxu0 %v1291
    %1901 = vmatpush1.bf16.msra.mxu0 %v1290
    %1902 = vmatprep.subr.bf16.mxu0 %v1295
    %1903 = vmatpush1.bf16.msra.mxu0 %v1294
    %1904 = vmatprep.subr.bf16.mxu0 %v1299
    %1905 = vmatpush1.bf16.msra.mxu0 %v1298
    %1906 = vmatprep.subr.bf16.mxu0 %v1303
    %1907 = vmatpush1.bf16.msra.mxu0 %v1302
    %1908 = vmatprep.subr.bf16.mxu0 %v1307
    %1909 = vmatpush1.bf16.msra.mxu0 %v1306
    %1910 = vmatprep.subr.bf16.mxu0 %v1311
    %1911 = vmatpush1.bf16.msra.mxu0 %v1310
    %1912 = vmatprep.subr.bf16.mxu0 %v1315
    %1913 = vmatpush1.bf16.msra.mxu0 %v1314
    %1914 = vmatprep.mubr.bf16.mxu0 %v345
    %1915 = vmatmul.mubr.bf16.gmra.mrb[0].mxu0 %v344
    %v1916 = vpop.f32.mrb[0].mxu0
    %v1917 = vadd.f32 %v1876, %v1916
    %v1918 = vpop.f32.mrb[0].mxu0
    %v1919 = vadd.f32 %v1878, %v1918
    %v1920 = vpop.f32.mrb[0].mxu0
    %v1921 = vpop.f32.mrb[0].mxu0
    %1922 = vdwg.mxu0
    %1923 = vmatprep.subr.bf16.mxu0 %v1319
    %1924 = vmatpush1.bf16.msra.mxu0 %v1318
    %1925 = vmatprep.subr.bf16.mxu0 %v1323
    %1926 = vmatpush1.bf16.msra.mxu0 %v1322
    %1927 = vmatprep.subr.bf16.mxu0 %v1327
    %1928 = vmatpush1.bf16.msra.mxu0 %v1326
    %1929 = vmatprep.subr.bf16.mxu0 %v1331
    %1930 = vmatpush1.bf16.msra.mxu0 %v1330
    %1931 = vmatprep.subr.bf16.mxu0 %v1335
    %1932 = vmatpush1.bf16.msra.mxu0 %v1334
    %1933 = vmatprep.subr.bf16.mxu0 %v1339
    %1934 = vmatpush1.bf16.msra.mxu0 %v1338
    %1935 = vmatprep.subr.bf16.mxu0 %v1343
    %1936 = vmatpush1.bf16.msra.mxu0 %v1342
    %1937 = vmatprep.subr.bf16.mxu0 %v1347
    %1938 = vmatpush1.bf16.msra.mxu0 %v1346
    %1939 = vmatprep.subr.bf16.mxu0 %v1351
    %1940 = vmatpush1.bf16.msra.mxu0 %v1350
    %1941 = vmatprep.subr.bf16.mxu0 %v1355
    %1942 = vmatpush1.bf16.msra.mxu0 %v1354
    %1943 = vmatprep.subr.bf16.mxu0 %v1359
    %1944 = vmatpush1.bf16.msra.mxu0 %v1358
    %1945 = vmatprep.subr.bf16.mxu0 %v1363
    %1946 = vmatpush1.bf16.msra.mxu0 %v1362
    %1947 = vmatprep.subr.bf16.mxu0 %v1367
    %1948 = vmatpush1.bf16.msra.mxu0 %v1366
    %1949 = vmatprep.subr.bf16.mxu0 %v1371
    %1950 = vmatpush1.bf16.msra.mxu0 %v1370
    %1951 = vmatprep.subr.bf16.mxu0 %v1375
    %1952 = vmatpush1.bf16.msra.mxu0 %v1374
    %1953 = vmatprep.subr.bf16.mxu0 %v1379
    %1954 = vmatpush1.bf16.msra.mxu0 %v1378
    %1955 = vmatprep.mubr.bf16.mxu0 %v347
    %1956 = vmatmul.mubr.bf16.gmra.mrb[0].mxu0 %v346
    %v1957 = vpop.f32.mrb[0].mxu0
    %v1958 = vadd.f32 %v1917, %v1957
    %v1959 = vpop.f32.mrb[0].mxu0
    %v1960 = vadd.f32 %v1919, %v1959
    %v1961 = vpop.f32.mrb[0].mxu0
    %v1962 = vpop.f32.mrb[0].mxu0
    %1963 = vdwg.mxu0
    %v1964 = vadd.f32 %v64, %v1794
    %v1965 = vadd.f32 %v65, %v1796
    %v1966 = vadd.f32 %v66, %v1958
    %v1967 = vadd.f32 %v67, %v1960
    %1968 = vst [vmem:[#allocation2] sm:$0xff] %v1964
    %1969 = vst [vmem:[#allocation2 + $0x8] sm:$0xff] %v1965
    %1970 = vst [vmem:[#allocation2 + $0x10] sm:$0xff] %v1966
    %1971 = vst [vmem:[#allocation2 + $0x18] sm:$0xff] %v1967
    // Predicated region
    $region42: #{discriminator_forward.1} parent=1 // pred_check
      %p1972 = pneg %p56
    $region43: #{discriminator_forward.1} parent=1 // pred_check_branch
      %1974 = sbr.rel (%p1972) target = $region45
    $region44: #{discriminator_forward.1} parent=1 // pred_region
      %v1975 = vld [vmem:[#allocation2] sm:$0xff]
      %v1976 = vld [vmem:[#allocation2 + $0x8] sm:$0xff]
      %v1977 = vld [vmem:[#allocation2 + $0x10] sm:$0xff]
      %v1978 = vld [vmem:[#allocation2 + $0x18] sm:$0xff]
      %v1979 = vld [vmem:[%s2] sm:$0xf]
      %v1981 = vlaneseq
      %v1982 = vshrl.u32 %v1981, 7
      %v1983 = vsub.s32 0, %v1982
      %v1984 = vrot.slane %v1979, %v1983
      %v1985 = vlaneseq
      %v1986 = vshrl.u32 %v1985, 7
      %v1987 = vsub.s32 1, %v1986
      %v1988 = vrot.slane %v1979, %v1987
      %v1989 = vlaneseq
      %v1990 = vshrl.u32 %v1989, 7
      %v1991 = vsub.s32 2, %v1990
      %v1992 = vrot.slane %v1979, %v1991
      %v1993 = vlaneseq
      %v1994 = vshrl.u32 %v1993, 7
      %v1995 = vsub.s32 3, %v1994
      %v1996 = vrot.slane %v1979, %v1995
      %v2001 = vadd.f32 %v1975, %v1984
      %v2002 = vadd.f32 %v1976, %v1988
      %v2003 = vadd.f32 %v1977, %v1992
      %v2004 = vadd.f32 %v1978, %v1996
      %v2005 = vmul.f32 %v2001, 0.1
      %v2006 = vmul.f32 %v2002, 0.1
      %v2007 = vmul.f32 %v2003, 0.1
      %v2008 = vmul.f32 %v2004, 0.1
      %v2009 = vmax.f32 %v2001, %v2005
      %v2010 = vmax.f32 %v2002, %v2006
      %v2011 = vmax.f32 %v2003, %v2007
      %v2012 = vmax.f32 %v2004, %v2008
      %v2013 = vpack.c.bf16 %v2009, %v2009
      %v2014 = vpack.c.bf16 %v2010, %v2010
      %v2015 = vpack.c.bf16 %v2011, %v2011
      %v2016 = vpack.c.bf16 %v2012, %v2012
      %v2017 = vld [vmem:[#allocation6] sm:$0xff]
      %v2018 = vld [vmem:[#allocation6 + $0x8] sm:$0xff]
      %v2019 = vld [vmem:[#allocation6 + $0x10] sm:$0xff]
      %v2020 = vld [vmem:[#allocation6 + $0x18] sm:$0xff]
      %v2021 = vld [vmem:[#allocation6 + $0x20] sm:$0xff]
      %v2022 = vld [vmem:[#allocation6 + $0x28] sm:$0xff]
      %v2023 = vld [vmem:[#allocation6 + $0x30] sm:$0xff]
      %v2024 = vld [vmem:[#allocation6 + $0x38] sm:$0xff]
      %v2025 = vld [vmem:[#allocation6 + $0x40] sm:$0xff]
      %v2026 = vld [vmem:[#allocation6 + $0x48] sm:$0xff]
      %v2027 = vld [vmem:[#allocation6 + $0x50] sm:$0xff]
      %v2028 = vld [vmem:[#allocation6 + $0x58] sm:$0xff]
      %v2029 = vld [vmem:[#allocation6 + $0x60] sm:$0xff]
      %v2030 = vld [vmem:[#allocation6 + $0x68] sm:$0xff]
      %v2031 = vld [vmem:[#allocation6 + $0x70] sm:$0xff]
      %v2032 = vld [vmem:[#allocation6 + $0x78] sm:$0xff]
      %v2033 = vld [vmem:[#allocation6 + $0x80] sm:$0xff]
      %v2034 = vld [vmem:[#allocation6 + $0x88] sm:$0xff]
      %v2035 = vld [vmem:[#allocation6 + $0x90] sm:$0xff]
      %v2036 = vld [vmem:[#allocation6 + $0x98] sm:$0xff]
      %v2037 = vld [vmem:[#allocation6 + $0xa0] sm:$0xff]
      %v2038 = vld [vmem:[#allocation6 + $0xa8] sm:$0xff]
      %v2039 = vld [vmem:[#allocation6 + $0xb0] sm:$0xff]
      %v2040 = vld [vmem:[#allocation6 + $0xb8] sm:$0xff]
      %v2041 = vld [vmem:[#allocation6 + $0xc0] sm:$0xff]
      %v2042 = vld [vmem:[#allocation6 + $0xc8] sm:$0xff]
      %v2043 = vld [vmem:[#allocation6 + $0xd0] sm:$0xff]
      %v2044 = vld [vmem:[#allocation6 + $0xd8] sm:$0xff]
      %v2045 = vld [vmem:[#allocation6 + $0xe0] sm:$0xff]
      %v2046 = vld [vmem:[#allocation6 + $0xe8] sm:$0xff]
      %v2047 = vld [vmem:[#allocation6 + $0xf0] sm:$0xff]
      %v2048 = vld [vmem:[#allocation6 + $0xf8] sm:$0xff]
      %v2049 = vld [vmem:[#allocation6 + $0x100] sm:$0xff]
      %v2050 = vld [vmem:[#allocation6 + $0x108] sm:$0xff]
      %v2051 = vld [vmem:[#allocation6 + $0x110] sm:$0xff]
      %v2052 = vld [vmem:[#allocation6 + $0x118] sm:$0xff]
      %v2053 = vld [vmem:[#allocation6 + $0x120] sm:$0xff]
      %v2054 = vld [vmem:[#allocation6 + $0x128] sm:$0xff]
      %v2055 = vld [vmem:[#allocation6 + $0x130] sm:$0xff]
      %v2056 = vld [vmem:[#allocation6 + $0x138] sm:$0xff]
      %v2057 = vld [vmem:[#allocation6 + $0x140] sm:$0xff]
      %v2058 = vld [vmem:[#allocation6 + $0x148] sm:$0xff]
      %v2059 = vld [vmem:[#allocation6 + $0x150] sm:$0xff]
      %v2060 = vld [vmem:[#allocation6 + $0x158] sm:$0xff]
      %v2061 = vld [vmem:[#allocation6 + $0x160] sm:$0xff]
      %v2062 = vld [vmem:[#allocation6 + $0x168] sm:$0xff]
      %v2063 = vld [vmem:[#allocation6 + $0x170] sm:$0xff]
      %v2064 = vld [vmem:[#allocation6 + $0x178] sm:$0xff]
      %v2065 = vld [vmem:[#allocation6 + $0x180] sm:$0xff]
      %v2066 = vld [vmem:[#allocation6 + $0x188] sm:$0xff]
      %v2067 = vld [vmem:[#allocation6 + $0x190] sm:$0xff]
      %v2068 = vld [vmem:[#allocation6 + $0x198] sm:$0xff]
      %v2069 = vld [vmem:[#allocation6 + $0x1a0] sm:$0xff]
      %v2070 = vld [vmem:[#allocation6 + $0x1a8] sm:$0xff]
      %v2071 = vld [vmem:[#allocation6 + $0x1b0] sm:$0xff]
      %v2072 = vld [vmem:[#allocation6 + $0x1b8] sm:$0xff]
      %v2073 = vld [vmem:[#allocation6 + $0x1c0] sm:$0xff]
      %v2074 = vld [vmem:[#allocation6 + $0x1c8] sm:$0xff]
      %v2075 = vld [vmem:[#allocation6 + $0x1d0] sm:$0xff]
      %v2076 = vld [vmem:[#allocation6 + $0x1d8] sm:$0xff]
      %v2077 = vld [vmem:[#allocation6 + $0x1e0] sm:$0xff]
      %v2078 = vld [vmem:[#allocation6 + $0x1e8] sm:$0xff]
      %v2079 = vld [vmem:[#allocation6 + $0x1f0] sm:$0xff]
      %v2080 = vld [vmem:[#allocation6 + $0x1f8] sm:$0xff]
      %v2081 = vld [vmem:[%s4] sm:$0x3]
      %v2083 = vlaneseq
      %v2084 = vshrl.u32 %v2083, 7
      %v2085 = vsub.s32 0, %v2084
      %v2086 = vrot.slane %v2081, %v2085
      %v2087 = vlaneseq
      %v2088 = vshrl.u32 %v2087, 7
      %v2089 = vsub.s32 1, %v2088
      %v2090 = vrot.slane %v2081, %v2089
      %v2157 = vunpack.c.l.b16 %v2017
      %v2158 = vunpack.c.h.b16 %v2017
      %v2159 = vunpack.c.l.b16 %v2018
      %v2160 = vunpack.c.h.b16 %v2018
      %v2161 = vunpack.c.l.b16 %v2019
      %v2162 = vunpack.c.h.b16 %v2019
      %v2163 = vunpack.c.l.b16 %v2020
      %v2164 = vunpack.c.h.b16 %v2020
      %v2165 = vunpack.c.l.b16 %v2021
      %v2166 = vunpack.c.h.b16 %v2021
      %v2167 = vunpack.c.l.b16 %v2022
      %v2168 = vunpack.c.h.b16 %v2022
      %v2169 = vunpack.c.l.b16 %v2023
      %v2170 = vunpack.c.h.b16 %v2023
      %v2171 = vunpack.c.l.b16 %v2024
      %v2172 = vunpack.c.h.b16 %v2024
      %v2173 = vunpack.c.l.b16 %v2025
      %v2174 = vunpack.c.h.b16 %v2025
      %v2175 = vunpack.c.l.b16 %v2026
      %v2176 = vunpack.c.h.b16 %v2026
      %v2177 = vunpack.c.l.b16 %v2027
      %v2178 = vunpack.c.h.b16 %v2027
      %v2179 = vunpack.c.l.b16 %v2028
      %v2180 = vunpack.c.h.b16 %v2028
      %v2181 = vunpack.c.l.b16 %v2029
      %v2182 = vunpack.c.h.b16 %v2029
      %v2183 = vunpack.c.l.b16 %v2030
      %v2184 = vunpack.c.h.b16 %v2030
      %v2185 = vunpack.c.l.b16 %v2031
      %v2186 = vunpack.c.h.b16 %v2031
      %v2187 = vunpack.c.l.b16 %v2032
      %v2188 = vunpack.c.h.b16 %v2032
      %v2189 = vunpack.c.l.b16 %v2033
      %v2190 = vunpack.c.h.b16 %v2033
      %v2191 = vunpack.c.l.b16 %v2034
      %v2192 = vunpack.c.h.b16 %v2034
      %v2193 = vunpack.c.l.b16 %v2035
      %v2194 = vunpack.c.h.b16 %v2035
      %v2195 = vunpack.c.l.b16 %v2036
      %v2196 = vunpack.c.h.b16 %v2036
      %v2197 = vunpack.c.l.b16 %v2037
      %v2198 = vunpack.c.h.b16 %v2037
      %v2199 = vunpack.c.l.b16 %v2038
      %v2200 = vunpack.c.h.b16 %v2038
      %v2201 = vunpack.c.l.b16 %v2039
      %v2202 = vunpack.c.h.b16 %v2039
      %v2203 = vunpack.c.l.b16 %v2040
      %v2204 = vunpack.c.h.b16 %v2040
      %v2205 = vunpack.c.l.b16 %v2041
      %v2206 = vunpack.c.h.b16 %v2041
      %v2207 = vunpack.c.l.b16 %v2042
      %v2208 = vunpack.c.h.b16 %v2042
      %v2209 = vunpack.c.l.b16 %v2043
      %v2210 = vunpack.c.h.b16 %v2043
      %v2211 = vunpack.c.l.b16 %v2044
      %v2212 = vunpack.c.h.b16 %v2044
      %v2213 = vunpack.c.l.b16 %v2045
      %v2214 = vunpack.c.h.b16 %v2045
      %v2215 = vunpack.c.l.b16 %v2046
      %v2216 = vunpack.c.h.b16 %v2046
      %v2217 = vunpack.c.l.b16 %v2047
      %v2218 = vunpack.c.h.b16 %v2047
      %v2219 = vunpack.c.l.b16 %v2048
      %v2220 = vunpack.c.h.b16 %v2048
      %v2221 = vunpack.c.l.b16 %v2049
      %v2222 = vunpack.c.h.b16 %v2049
      %v2223 = vunpack.c.l.b16 %v2050
      %v2224 = vunpack.c.h.b16 %v2050
      %v2225 = vunpack.c.l.b16 %v2051
      %v2226 = vunpack.c.h.b16 %v2051
      %v2227 = vunpack.c.l.b16 %v2052
      %v2228 = vunpack.c.h.b16 %v2052
      %v2229 = vunpack.c.l.b16 %v2053
      %v2230 = vunpack.c.h.b16 %v2053
      %v2231 = vunpack.c.l.b16 %v2054
      %v2232 = vunpack.c.h.b16 %v2054
      %v2233 = vunpack.c.l.b16 %v2055
      %v2234 = vunpack.c.h.b16 %v2055
      %v2235 = vunpack.c.l.b16 %v2056
      %v2236 = vunpack.c.h.b16 %v2056
      %v2237 = vunpack.c.l.b16 %v2057
      %v2238 = vunpack.c.h.b16 %v2057
      %v2239 = vunpack.c.l.b16 %v2058
      %v2240 = vunpack.c.h.b16 %v2058
      %v2241 = vunpack.c.l.b16 %v2059
      %v2242 = vunpack.c.h.b16 %v2059
      %v2243 = vunpack.c.l.b16 %v2060
      %v2244 = vunpack.c.h.b16 %v2060
      %v2245 = vunpack.c.l.b16 %v2061
      %v2246 = vunpack.c.h.b16 %v2061
      %v2247 = vunpack.c.l.b16 %v2062
      %v2248 = vunpack.c.h.b16 %v2062
      %v2249 = vunpack.c.l.b16 %v2063
      %v2250 = vunpack.c.h.b16 %v2063
      %v2251 = vunpack.c.l.b16 %v2064
      %v2252 = vunpack.c.h.b16 %v2064
      %v2253 = vunpack.c.l.b16 %v2065
      %v2254 = vunpack.c.h.b16 %v2065
      %v2255 = vunpack.c.l.b16 %v2066
      %v2256 = vunpack.c.h.b16 %v2066
      %v2257 = vunpack.c.l.b16 %v2067
      %v2258 = vunpack.c.h.b16 %v2067
      %v2259 = vunpack.c.l.b16 %v2068
      %v2260 = vunpack.c.h.b16 %v2068
      %v2261 = vunpack.c.l.b16 %v2069
      %v2262 = vunpack.c.h.b16 %v2069
      %v2263 = vunpack.c.l.b16 %v2070
      %v2264 = vunpack.c.h.b16 %v2070
      %v2265 = vunpack.c.l.b16 %v2071
      %v2266 = vunpack.c.h.b16 %v2071
      %v2267 = vunpack.c.l.b16 %v2072
      %v2268 = vunpack.c.h.b16 %v2072
      %v2269 = vunpack.c.l.b16 %v2073
      %v2270 = vunpack.c.h.b16 %v2073
      %v2271 = vunpack.c.l.b16 %v2074
      %v2272 = vunpack.c.h.b16 %v2074
      %v2273 = vunpack.c.l.b16 %v2075
      %v2274 = vunpack.c.h.b16 %v2075
      %v2275 = vunpack.c.l.b16 %v2076
      %v2276 = vunpack.c.h.b16 %v2076
      %v2277 = vunpack.c.l.b16 %v2077
      %v2278 = vunpack.c.h.b16 %v2077
      %v2279 = vunpack.c.l.b16 %v2078
      %v2280 = vunpack.c.h.b16 %v2078
      %v2281 = vunpack.c.l.b16 %v2079
      %v2282 = vunpack.c.h.b16 %v2079
      %v2283 = vunpack.c.l.b16 %v2080
      %v2284 = vunpack.c.h.b16 %v2080
      %v2285 = vpack.c.b16 %v2159, %v2157
      %v2286 = vpack.c.b16 %v2160, %v2158
      %v2287 = vpack.c.b16 %v2163, %v2161
      %v2288 = vpack.c.b16 %v2164, %v2162
      %v2289 = vpack.c.b16 %v2167, %v2165
      %v2290 = vpack.c.b16 %v2168, %v2166
      %v2291 = vpack.c.b16 %v2171, %v2169
      %v2292 = vpack.c.b16 %v2172, %v2170
      %v2293 = vpack.c.b16 %v2175, %v2173
      %v2294 = vpack.c.b16 %v2176, %v2174
      %v2295 = vpack.c.b16 %v2179, %v2177
      %v2296 = vpack.c.b16 %v2180, %v2178
      %v2297 = vpack.c.b16 %v2183, %v2181
      %v2298 = vpack.c.b16 %v2184, %v2182
      %v2299 = vpack.c.b16 %v2187, %v2185
      %v2300 = vpack.c.b16 %v2188, %v2186
      %v2301 = vpack.c.b16 %v2191, %v2189
      %v2302 = vpack.c.b16 %v2192, %v2190
      %v2303 = vpack.c.b16 %v2195, %v2193
      %v2304 = vpack.c.b16 %v2196, %v2194
      %v2305 = vpack.c.b16 %v2199, %v2197
      %v2306 = vpack.c.b16 %v2200, %v2198
      %v2307 = vpack.c.b16 %v2203, %v2201
      %v2308 = vpack.c.b16 %v2204, %v2202
      %v2309 = vpack.c.b16 %v2207, %v2205
      %v2310 = vpack.c.b16 %v2208, %v2206
      %v2311 = vpack.c.b16 %v2211, %v2209
      %v2312 = vpack.c.b16 %v2212, %v2210
      %v2313 = vpack.c.b16 %v2215, %v2213
      %v2314 = vpack.c.b16 %v2216, %v2214
      %v2315 = vpack.c.b16 %v2219, %v2217
      %v2316 = vpack.c.b16 %v2220, %v2218
      %v2317 = vpack.c.b16 %v2223, %v2221
      %v2318 = vpack.c.b16 %v2224, %v2222
      %v2319 = vpack.c.b16 %v2227, %v2225
      %v2320 = vpack.c.b16 %v2228, %v2226
      %v2321 = vpack.c.b16 %v2231, %v2229
      %v2322 = vpack.c.b16 %v2232, %v2230
      %v2323 = vpack.c.b16 %v2235, %v2233
      %v2324 = vpack.c.b16 %v2236, %v2234
      %v2325 = vpack.c.b16 %v2239, %v2237
      %v2326 = vpack.c.b16 %v2240, %v2238
      %v2327 = vpack.c.b16 %v2243, %v2241
      %v2328 = vpack.c.b16 %v2244, %v2242
      %v2329 = vpack.c.b16 %v2247, %v2245
      %v2330 = vpack.c.b16 %v2248, %v2246
      %v2331 = vpack.c.b16 %v2251, %v2249
      %v2332 = vpack.c.b16 %v2252, %v2250
      %v2333 = vpack.c.b16 %v2255, %v2253
      %v2334 = vpack.c.b16 %v2256, %v2254
      %v2335 = vpack.c.b16 %v2259, %v2257
      %v2336 = vpack.c.b16 %v2260, %v2258
      %v2337 = vpack.c.b16 %v2263, %v2261
      %v2338 = vpack.c.b16 %v2264, %v2262
      %v2339 = vpack.c.b16 %v2267, %v2265
      %v2340 = vpack.c.b16 %v2268, %v2266
      %v2341 = vpack.c.b16 %v2271, %v2269
      %v2342 = vpack.c.b16 %v2272, %v2270
      %v2343 = vpack.c.b16 %v2275, %v2273
      %v2344 = vpack.c.b16 %v2276, %v2274
      %v2345 = vpack.c.b16 %v2279, %v2277
      %v2346 = vpack.c.b16 %v2280, %v2278
      %v2347 = vpack.c.b16 %v2283, %v2281
      %v2348 = vpack.c.b16 %v2284, %v2282
      %2413 = vmatprep.subr.bf16.mxu0 %v2286
      %2414 = vmatpush1.bf16.msra.mxu0 %v2285
      %2415 = vmatprep.subr.bf16.mxu0 %v2288
      %2416 = vmatpush1.bf16.msra.mxu0 %v2287
      %2417 = vmatprep.subr.bf16.mxu0 %v2290
      %2418 = vmatpush1.bf16.msra.mxu0 %v2289
      %2419 = vmatprep.subr.bf16.mxu0 %v2292
      %2420 = vmatpush1.bf16.msra.mxu0 %v2291
      %2421 = vmatprep.subr.bf16.mxu0 %v2294
      %2422 = vmatpush1.bf16.msra.mxu0 %v2293
      %2423 = vmatprep.subr.bf16.mxu0 %v2296
      %2424 = vmatpush1.bf16.msra.mxu0 %v2295
      %2425 = vmatprep.subr.bf16.mxu0 %v2298
      %2426 = vmatpush1.bf16.msra.mxu0 %v2297
      %2427 = vmatprep.subr.bf16.mxu0 %v2300
      %2428 = vmatpush1.bf16.msra.mxu0 %v2299
      %2429 = vmatprep.subr.bf16.mxu0 %v2302
      %2430 = vmatpush1.bf16.msra.mxu0 %v2301
      %2431 = vmatprep.subr.bf16.mxu0 %v2304
      %2432 = vmatpush1.bf16.msra.mxu0 %v2303
      %2433 = vmatprep.subr.bf16.mxu0 %v2306
      %2434 = vmatpush1.bf16.msra.mxu0 %v2305
      %2435 = vmatprep.subr.bf16.mxu0 %v2308
      %2436 = vmatpush1.bf16.msra.mxu0 %v2307
      %2437 = vmatprep.subr.bf16.mxu0 %v2310
      %2438 = vmatpush1.bf16.msra.mxu0 %v2309
      %2439 = vmatprep.subr.bf16.mxu0 %v2312
      %2440 = vmatpush1.bf16.msra.mxu0 %v2311
      %2441 = vmatprep.subr.bf16.mxu0 %v2314
      %2442 = vmatpush1.bf16.msra.mxu0 %v2313
      %2443 = vmatprep.subr.bf16.mxu0 %v2316
      %2444 = vmatpush1.bf16.msra.mxu0 %v2315
      %2445 = vmatprep.mubr.bf16.mxu0 %v2014
      %2446 = vmatmul.mubr.bf16.gmra.mrb[0].mxu0 %v2013
      %v2447 = vpop.f32.mrb[0].mxu0
      %v2448 = vadd.f32 %v2086, %v2447
      %v2449 = vpop.f32.mrb[0].mxu0
      %v2450 = vadd.f32 %v2090, %v2449
      %v2451 = vpop.f32.mrb[0].mxu0
      %v2452 = vpop.f32.mrb[0].mxu0
      %2453 = vdwg.mxu0
      %2454 = vmatprep.subr.bf16.mxu0 %v2318
      %2455 = vmatpush1.bf16.msra.mxu0 %v2317
      %2456 = vmatprep.subr.bf16.mxu0 %v2320
      %2457 = vmatpush1.bf16.msra.mxu0 %v2319
      %2458 = vmatprep.subr.bf16.mxu0 %v2322
      %2459 = vmatpush1.bf16.msra.mxu0 %v2321
      %2460 = vmatprep.subr.bf16.mxu0 %v2324
      %2461 = vmatpush1.bf16.msra.mxu0 %v2323
      %2462 = vmatprep.subr.bf16.mxu0 %v2326
      %2463 = vmatpush1.bf16.msra.mxu0 %v2325
      %2464 = vmatprep.subr.bf16.mxu0 %v2328
      %2465 = vmatpush1.bf16.msra.mxu0 %v2327
      %2466 = vmatprep.subr.bf16.mxu0 %v2330
      %2467 = vmatpush1.bf16.msra.mxu0 %v2329
      %2468 = vmatprep.subr.bf16.mxu0 %v2332
      %2469 = vmatpush1.bf16.msra.mxu0 %v2331
      %2470 = vmatprep.subr.bf16.mxu0 %v2334
      %2471 = vmatpush1.bf16.msra.mxu0 %v2333
      %2472 = vmatprep.subr.bf16.mxu0 %v2336
      %2473 = vmatpush1.bf16.msra.mxu0 %v2335
      %2474 = vmatprep.subr.bf16.mxu0 %v2338
      %2475 = vmatpush1.bf16.msra.mxu0 %v2337
      %2476 = vmatprep.subr.bf16.mxu0 %v2340
      %2477 = vmatpush1.bf16.msra.mxu0 %v2339
      %2478 = vmatprep.subr.bf16.mxu0 %v2342
      %2479 = vmatpush1.bf16.msra.mxu0 %v2341
      %2480 = vmatprep.subr.bf16.mxu0 %v2344
      %2481 = vmatpush1.bf16.msra.mxu0 %v2343
      %2482 = vmatprep.subr.bf16.mxu0 %v2346
      %2483 = vmatpush1.bf16.msra.mxu0 %v2345
      %2484 = vmatprep.subr.bf16.mxu0 %v2348
      %2485 = vmatpush1.bf16.msra.mxu0 %v2347
      %2486 = vmatprep.mubr.bf16.mxu0 %v2016
      %2487 = vmatmul.mubr.bf16.gmra.mrb[0].mxu0 %v2015
      %v2488 = vpop.f32.mrb[0].mxu0
      %v2489 = vadd.f32 %v2448, %v2488
      %v2490 = vpop.f32.mrb[0].mxu0
      %v2491 = vadd.f32 %v2450, %v2490
      %v2492 = vpop.f32.mrb[0].mxu0
      %v2493 = vpop.f32.mrb[0].mxu0
      %2494 = vdwg.mxu0
      %v2495 = vmul.f32 %v2489, 0.2
      %v2496 = vmul.f32 %v2491, 0.2
      %v2497 = vmax.f32 %v2489, %v2495
      %v2498 = vmax.f32 %v2491, %v2496
      %v2499 = vld [vmem:[%s5] sm:$0x3]
      %v2501 = vlaneseq
      %v2502 = vshrl.u32 %v2501, 7
      %v2503 = vsub.s32 0, %v2502
      %v2504 = vrot.slane %v2499, %v2503
      %v2505 = vlaneseq
      %v2506 = vshrl.u32 %v2505, 7
      %v2507 = vsub.s32 1, %v2506
      %v2508 = vrot.slane %v2499, %v2507
      %v2511 = vmul.f32 %v2497, %v2504
      %v2512 = vmul.f32 %v2498, %v2508
      %v2513 = vadd.f32 %v2511, %v2512
      %2514 = vadd.xlane.f32.xlu0 %v2513
      %v2515 = vpop.xlane.xlu0 %2514
      %v2516 = vld [vmem:[#allocation3] sm:$0x1]
      %v2518 = vlaneseq
      %v2519 = vshrl.u32 %v2518, 7
      %v2520 = vsub.s32 0, %v2519
      %v2521 = vrot.slane %v2516, %v2520
      %v2523 = vadd.f32 %v2515, %v2521
      %v2524 = vxor.u32 %v2523, 2147483648
      %v2525 = vmul.f32 %v2524, 1.442695
      %v2526 = vpow.pop %v2525
      %v2527 = vadd.f32 %v2526, 1.0
      %v2528 = vrcp.pop %v2527
      %v2529 = vmul.f32 1.0, %v2528
      %2531 = vset.pattern.permute.xlu0 0
      %2532 = vperm.xlu0 %2531, %v2529
      %v2533 = vpop.permute.xlu0 %2532
      %2535 = vst [vmem:[%s7] sm:$0xff] %v2533
    $region45: #{discriminator_forward.1} parent=1 // pred_fallthru
      _
    // Predicated region
    $region46: #{discriminator_forward.1} parent=1 // pred_check
      _
    $region47: #{discriminator_forward.1} parent=1 // pred_check_branch
      %2537 = sbr.rel (0) target = $region49
    $region48: #{discriminator_forward.1} parent=1 // pred_region
      _
    $region49: #{discriminator_forward.1} parent=1 // pred_fallthru
      _
    // Predicated region
    $region50: #{discriminator_forward.1} parent=1 // pred_check
      _
    $region51: #{discriminator_forward.1} parent=1 // pred_check_branch
      %2539 = sbr.rel (0) target = $region53
    $region52: #{discriminator_forward.1} parent=1 // pred_region
      _
    $region53: #{discriminator_forward.1} parent=1 // pred_fallthru
      _
    %2540 = vsyncpa [#allocation5], 1
    %2541 = vsyncpa [#allocation7], 1

</llo_original>
